<compile_context>
chip_gen: v5e
topology: v5e:2x2
jax: 0.10.0
libtpu: 0.0.40
codegen_flags: <defaults>
</compile_context>

<pallas_src>
import numpy as np
import jax
import jax.numpy as jnp
from jax import lax
from jax.experimental import pallas as pl
from jax.experimental.pallas import tpu as pltpu

POOL_KERNELS = (1, 3, 5, 9)
CONV_K = 7
DILATION_RATE = 2
DILATIONS = tuple(p // DILATION_RATE + 1 for p in POOL_KERNELS)  # (1, 2, 3, 5)
MAX_HALF = POOL_KERNELS[-1] // 2                                 # 4 (time halo)
EPS = 1e-5  # InstanceNorm1d default eps


def _enhance_kernel(scale_ref, bias_ref, band_ref, xpad_ref, o_ref):
    t = o_ref.shape[1]
    xp = xpad_ref[...].astype(jnp.float32)        # (bn, t + 2*MAX_HALF)
    ap = jnp.abs(xp)

    def sl(v, s):
        # v_unpadded[:, i + s] with zero padding, via a static slice of the halo.
        return v[:, MAX_HALF + s: MAX_HALF + s + t]

    x = sl(xp, 0)
    # ---- incremental max pools over |x| ---------------------------------
    # |x| >= 0 and every window holds >=1 real sample, so the zero halo is
    # equivalent to PyTorch's -inf max-pool padding.
    mx3 = jnp.maximum(jnp.maximum(sl(ap, -1), sl(ap, 1)), sl(ap, 0))   # [-1, 1]
    mx5 = jnp.maximum(jnp.maximum(sl(ap, -2), sl(ap, 2)), mx3)         # [-2, 2]
    mx7 = jnp.maximum(jnp.maximum(sl(ap, -3), sl(ap, 3)), mx5)         # [-3, 3]
    mx9 = jnp.maximum(jnp.maximum(sl(ap, -4), sl(ap, 4)), mx7)         # [-4, 4]

    # ---- avg-pool + dilated conv as one banded MXU matmul per branch ----
    def branch(z, bi):
        y = jnp.dot(z, band_ref[bi], preferred_element_type=jnp.float32)
        # InstanceNorm1d: per-row biased stats over time (two-pass variance).
        mean = jnp.mean(y, axis=1, keepdims=True)
        cen = y - mean
        var = jnp.mean(cen * cen, axis=1, keepdims=True)
        # folded merge: merge_w[bi] * (norm * gamma[bi] + beta[bi]) -> scale * norm
        return (scale_ref[bi] * lax.rsqrt(var + EPS)) * cen

    out = branch(x, 0)              # p=1 branch: TrendPool is the identity (no |.|)
    out = out + branch(mx3, 1)
    out = out + branch(mx5, 2)
    out = out + branch(mx9, 3)
    o_ref[...] = (out + bias_ref[0]).astype(o_ref.dtype)


def _band_matrices(conv_w, t):
    """(4, T, T) exact fold of avg_pool1d(count_include_pad=True) + dilated conv.

    y[:, i] = sum_m mx[:, m] * band[bi, m, i] reproduces
    conv1d(avg_pool1d(mx, p, pad=p//2), w[bi], dilation=d, padding=3*d)
    (conv bias dropped: it cancels exactly in the InstanceNorm mean subtraction).
    """
    m_idx = np.arange(t)[:, None]   # pooled-input (source) position
    i_idx = np.arange(t)[None, :]   # conv output position
    bands = []
    for bi, (p, d) in enumerate(zip(POOL_KERNELS, DILATIONS)):
        h = p // 2
        acc = jnp.zeros((t, t), jnp.float32)
        for j in range(CONV_K):
            q = i_idx + (j - CONV_K // 2) * d          # avg-pool output read by tap j
            struct = (np.abs(m_idx - q) <= h) & (q >= 0) & (q < t)
            acc = acc + conv_w[bi, j] * jnp.asarray(struct.astype(np.float32) / p)
        bands.append(acc)
    return jnp.stack(bands)


def _pick_row_tile(n, t):
    # Keep the per-block working set around ~10 MiB so the kernel fits the
    # smallest scoped-VMEM default (16 MiB on v5e; 32 MiB on v6e/v7x).
    tpad = t + 2 * MAX_HALF
    budget = 10 * 1024 * 1024 - 32 * t * t            # double-buffered band (4,t,t) f32
    per_row = 4 * (2 * tpad + 2 * t + 14 * t)         # in/out double buffers + live temps
    bn = (budget // max(per_row, 1)) // 8 * 8
    bn = max(8, min(512, bn))
    return min(bn, max(8, -(-n // 8) * 8))


def enhance_block(x, conv_w, conv_b, gamma, beta, merge_w, merge_b, *, row_tile=None):
    """x: (b, c, t) float32 -> (b, c, t), matching EnhanceBlock.forward."""
    del conv_b  # exactly cancelled by InstanceNorm's per-row mean subtraction
    b, c, t = x.shape
    n = b * c
    xr = x.reshape(n, t)                                      # '(b c) t'

    # ---- host-side constant folding -------------------------------------
    scale = (merge_w * gamma).astype(jnp.float32)                               # (4,)
    total_bias = (jnp.sum(merge_w * beta) + merge_b[0]).astype(jnp.float32).reshape(1)
    band = _band_matrices(conv_w.astype(jnp.float32), t)                        # (4,t,t)

    # ---- row tiling + time halo ------------------------------------------
    bn = _pick_row_tile(n, t) if row_tile is None else int(row_tile)
    assert bn % 8 == 0, "row_tile must be a multiple of 8 (sublane)"
    grid_n = -(-n // bn)
    n_pad = grid_n * bn
    tpad = t + 2 * MAX_HALF
    # zero-pad rows (discarded below) and time (the max-pool halo, |0| = 0)
    xp = jnp.pad(xr, ((0, n_pad - n), (MAX_HALF, MAX_HALF)))

    smem = pl.BlockSpec(memory_space=pltpu.MemorySpace.SMEM)
    out = pl.pallas_call(
        _enhance_kernel,
        out_shape=jax.ShapeDtypeStruct((n_pad, t), x.dtype),
        grid_spec=pltpu.PrefetchScalarGridSpec(
            num_scalar_prefetch=0,
            grid=(grid_n,),
            in_specs=[smem, smem,
                      pl.BlockSpec((4, t, t), lambda i: (0, 0, 0)),
                      pl.BlockSpec((bn, tpad), lambda i: (i, 0))],
            out_specs=pl.BlockSpec((bn, t), lambda i: (i, 0)),
        ),
        compiler_params=pltpu.CompilerParams(
            dimension_semantics=("parallel",)),
    )(scale, total_bias, band, xp)
    return out[:n].reshape(b, c, t)


def enhance_block_ref(x, conv_w, conv_b, gamma, beta, merge_w, merge_b):
    """Pure-JAX reference (lax.reduce_window / lax.conv) mirroring the PyTorch module."""
    b, c, t = x.shape
    xr = x.reshape(b * c, 1, t)
    branches = []
    for bi, (p, d) in enumerate(zip(POOL_KERNELS, DILATIONS)):
        z = xr
        if p > 1:
            a = jnp.abs(z)
            pad = [(0, 0), (0, 0), (p // 2, p // 2)]
            mx = lax.reduce_window(a, -jnp.inf, lax.max, (1, 1, p), (1, 1, 1), pad)
            sm = lax.reduce_window(mx, 0.0, lax.add, (1, 1, p), (1, 1, 1), pad)
            z = sm / p
        w = conv_w[bi].reshape(1, 1, CONV_K)
        y = lax.conv_general_dilated(
            z, w, window_strides=(1,), padding=[(3 * d, 3 * d)],
            rhs_dilation=(d,), dimension_numbers=("NCH", "OIH", "NCH"),
            precision=lax.Precision.HIGHEST)
        branches.append(y + conv_b[bi])
    y = jnp.concatenate(branches, axis=1)                      # (b*c, 4, t)
    mean = y.mean(axis=2, keepdims=True)
    var = ((y - mean) ** 2).mean(axis=2, keepdims=True)
    y_hat = (y - mean) / jnp.sqrt(var + EPS)
    y_hat = y_hat * gamma.reshape(1, 4, 1) + beta.reshape(1, 4, 1)
    out = (y_hat * merge_w.reshape(1, 4, 1)).sum(axis=1) + merge_b[0]
    return out.reshape(b, c, t)


if __name__ == "__main__":
    key = jax.random.PRNGKey(0)
    kx, kw, kb, kg, kbt, kmw, kmb = jax.random.split(key, 7)
    B, C, T = 2, 8, 256   # N = b*c = 16 rows; T = 2*128 keeps lanes dense

    x = jax.random.normal(kx, (B, C, T), jnp.float32)
    # Deterministic synthetic parameters (shapes from __init__; no checkpoint load):
    conv_w = 0.3 * jax.random.normal(kw, (4, CONV_K), jnp.float32)   # 4x Conv1d(1,1,7).weight
    conv_b = 0.1 * jax.random.normal(kb, (4,), jnp.float32)          # 4x Conv1d(1,1,7).bias
    gamma = 1.0 + 0.1 * jax.random.normal(kg, (4,), jnp.float32)     # InstanceNorm1d.weight
    beta = 0.1 * jax.random.normal(kbt, (4,), jnp.float32)           # InstanceNorm1d.bias
    merge_w = 0.5 * jax.random.normal(kmw, (4,), jnp.float32)        # Conv1d(4,1,1).weight
    merge_b = 0.1 * jax.random.normal(kmb, (1,), jnp.float32)        # Conv1d(4,1,1).bias

    y_ref = enhance_block_ref(x, conv_w, conv_b, gamma, beta, merge_w, merge_b)

    # Run both the auto row tile (single block) and a forced multi-block grid
    # (exercises pipelining, band revisiting and row tiling).
    for rt in (None, 8):
        y = enhance_block(x, conv_w, conv_b, gamma, beta, merge_w, merge_b, row_tile=rt)
        jax.block_until_ready(y)
        assert y.shape == (B, C, T)
        err = float(jnp.max(jnp.abs(y - y_ref)))
        assert err < 2e-3, f"row_tile={rt} max abs err {err}"
    print("KERNEL_OK")
</pallas_src>

<mosaic_0001>
module attributes {stable_mosaic.version = 11 : i64} {
  func.func @_enhance_kernel(%arg0: i32, %arg1: memref<4xf32, #tpu.memory_space<smem>>, %arg2: memref<1xf32, #tpu.memory_space<smem>>, %arg3: memref<4x256x256xf32, #tpu.memory_space<vmem>>, %arg4: memref<16x264xf32, #tpu.memory_space<vmem>>, %arg5: memref<16x256xf32, #tpu.memory_space<vmem>>) attributes {dimension_semantics = [#tpu.dimension_semantics<parallel>], iteration_bounds = array<i64: 1>, scalar_prefetch = 0 : i64, scratch_operands = 0 : i64, tpu.core_type = #tpu.core_type<tc>, window_params = [{transform_indices = @transform_0, window_bounds = array<i64: 4>}, {transform_indices = @transform_1, window_bounds = array<i64: 1>}, {pipeline_mode = #tpu.pipeline_mode<synchronous>, transform_indices = @transform_2, window_bounds = array<i64: 4, 256, 256>}, {transform_indices = @transform_3, window_bounds = array<i64: 16, 264>}, {transform_indices = @transform_4, window_bounds = array<i64: 16, 256>}]} {
    %c0 = arith.constant 0 : index
    %c0_0 = arith.constant 0 : index
    %0 = vector.load %arg4[%c0, %c0_0] : memref<16x264xf32, #tpu.memory_space<vmem>>, vector<16x264xf32>
    %1 = math.absf %0 : vector<16x264xf32>
    %2 = vector.extract_strided_slice %0 {offsets = [0, 4], sizes = [16, 256], strides = [1, 1]} : vector<16x264xf32> to vector<16x256xf32>
    %3 = vector.extract_strided_slice %1 {offsets = [0, 3], sizes = [16, 256], strides = [1, 1]} : vector<16x264xf32> to vector<16x256xf32>
    %4 = vector.extract_strided_slice %1 {offsets = [0, 5], sizes = [16, 256], strides = [1, 1]} : vector<16x264xf32> to vector<16x256xf32>
    %5 = arith.maximumf %3, %4 : vector<16x256xf32>
    %6 = vector.extract_strided_slice %1 {offsets = [0, 4], sizes = [16, 256], strides = [1, 1]} : vector<16x264xf32> to vector<16x256xf32>
    %7 = arith.maximumf %5, %6 : vector<16x256xf32>
    %8 = vector.extract_strided_slice %1 {offsets = [0, 2], sizes = [16, 256], strides = [1, 1]} : vector<16x264xf32> to vector<16x256xf32>
    %9 = vector.extract_strided_slice %1 {offsets = [0, 6], sizes = [16, 256], strides = [1, 1]} : vector<16x264xf32> to vector<16x256xf32>
    %10 = arith.maximumf %8, %9 : vector<16x256xf32>
    %11 = arith.maximumf %10, %7 : vector<16x256xf32>
    %12 = vector.extract_strided_slice %1 {offsets = [0, 1], sizes = [16, 256], strides = [1, 1]} : vector<16x264xf32> to vector<16x256xf32>
    %13 = vector.extract_strided_slice %1 {offsets = [0, 7], sizes = [16, 256], strides = [1, 1]} : vector<16x264xf32> to vector<16x256xf32>
    %14 = arith.maximumf %12, %13 : vector<16x256xf32>
    %15 = arith.maximumf %14, %11 : vector<16x256xf32>
    %16 = vector.extract_strided_slice %1 {offsets = [0, 0], sizes = [16, 256], strides = [1, 1]} : vector<16x264xf32> to vector<16x256xf32>
    %17 = vector.extract_strided_slice %1 {offsets = [0, 8], sizes = [16, 256], strides = [1, 1]} : vector<16x264xf32> to vector<16x256xf32>
    %18 = arith.maximumf %16, %17 : vector<16x256xf32>
    %19 = arith.maximumf %18, %15 : vector<16x256xf32>
    %c0_1 = arith.constant 0 : index
    %c0_2 = arith.constant 0 : index
    %c0_3 = arith.constant 0 : index
    %20 = vector.load %arg3[%c0_1, %c0_2, %c0_3] : memref<4x256x256xf32, #tpu.memory_space<vmem>>, vector<1x256x256xf32>
    %21 = vector.shape_cast %20 : vector<1x256x256xf32> to vector<256x256xf32>
    %cst = arith.constant dense<0.000000e+00> : vector<16x256xf32>
    %22 = tpu.matmul %2, %21, %cst {dimension_numbers = #tpu.dot_dimension_numbers<[1], [0], [0], [1], [0, 0, 1, 1], [], []>} : vector<16x256xf32>, vector<256x256xf32>, vector<16x256xf32> -> vector<16x256xf32>
    %cst_4 = arith.constant dense<0.000000e+00> : vector<16xf32>
    %23 = vector.multi_reduction <add>, %22, %cst_4 [1] : vector<16x256xf32> to vector<16xf32>
    %24 = vector.shape_cast %23 : vector<16xf32> to vector<16x1xf32>
    %cst_5 = arith.constant 2.560000e+02 : f32
    %25 = vector.broadcast %cst_5 : f32 to vector<16x1xf32>
    %26 = arith.divf %24, %25 : vector<16x1xf32>
    %27 = vector.broadcast %26 : vector<16x1xf32> to vector<16x256xf32>
    %28 = arith.subf %22, %27 : vector<16x256xf32>
    %29 = arith.mulf %28, %28 : vector<16x256xf32>
    %cst_6 = arith.constant dense<0.000000e+00> : vector<16xf32>
    %30 = vector.multi_reduction <add>, %29, %cst_6 [1] : vector<16x256xf32> to vector<16xf32>
    %31 = vector.shape_cast %30 : vector<16xf32> to vector<16x1xf32>
    %cst_7 = arith.constant 2.560000e+02 : f32
    %32 = vector.broadcast %cst_7 : f32 to vector<16x1xf32>
    %33 = arith.divf %31, %32 : vector<16x1xf32>
    %c0_8 = arith.constant 0 : index
    %34 = memref.load %arg1[%c0_8] : memref<4xf32, #tpu.memory_space<smem>>
    %cst_9 = arith.constant 9.99999974E-6 : f32
    %35 = vector.broadcast %cst_9 : f32 to vector<16x1xf32>
    %36 = arith.addf %33, %35 : vector<16x1xf32>
    %37 = math.rsqrt %36 : vector<16x1xf32>
    %38 = vector.broadcast %34 : f32 to vector<16x1xf32>
    %39 = arith.mulf %38, %37 : vector<16x1xf32>
    %40 = vector.broadcast %39 : vector<16x1xf32> to vector<16x256xf32>
    %41 = arith.mulf %40, %28 : vector<16x256xf32>
    %c1 = arith.constant 1 : index
    %c0_10 = arith.constant 0 : index
    %c0_11 = arith.constant 0 : index
    %42 = vector.load %arg3[%c1, %c0_10, %c0_11] : memref<4x256x256xf32, #tpu.memory_space<vmem>>, vector<1x256x256xf32>
    %43 = vector.shape_cast %42 : vector<1x256x256xf32> to vector<256x256xf32>
    %cst_12 = arith.constant dense<0.000000e+00> : vector<16x256xf32>
    %44 = tpu.matmul %7, %43, %cst_12 {dimension_numbers = #tpu.dot_dimension_numbers<[1], [0], [0], [1], [0, 0, 1, 1], [], []>} : vector<16x256xf32>, vector<256x256xf32>, vector<16x256xf32> -> vector<16x256xf32>
    %cst_13 = arith.constant dense<0.000000e+00> : vector<16xf32>
    %45 = vector.multi_reduction <add>, %44, %cst_13 [1] : vector<16x256xf32> to vector<16xf32>
    %46 = vector.shape_cast %45 : vector<16xf32> to vector<16x1xf32>
    %cst_14 = arith.constant 2.560000e+02 : f32
    %47 = vector.broadcast %cst_14 : f32 to vector<16x1xf32>
    %48 = arith.divf %46, %47 : vector<16x1xf32>
    %49 = vector.broadcast %48 : vector<16x1xf32> to vector<16x256xf32>
    %50 = arith.subf %44, %49 : vector<16x256xf32>
    %51 = arith.mulf %50, %50 : vector<16x256xf32>
    %cst_15 = arith.constant dense<0.000000e+00> : vector<16xf32>
    %52 = vector.multi_reduction <add>, %51, %cst_15 [1] : vector<16x256xf32> to vector<16xf32>
    %53 = vector.shape_cast %52 : vector<16xf32> to vector<16x1xf32>
    %cst_16 = arith.constant 2.560000e+02 : f32
    %54 = vector.broadcast %cst_16 : f32 to vector<16x1xf32>
    %55 = arith.divf %53, %54 : vector<16x1xf32>
    %c1_17 = arith.constant 1 : index
    %56 = memref.load %arg1[%c1_17] : memref<4xf32, #tpu.memory_space<smem>>
    %cst_18 = arith.constant 9.99999974E-6 : f32
    %57 = vector.broadcast %cst_18 : f32 to vector<16x1xf32>
    %58 = arith.addf %55, %57 : vector<16x1xf32>
    %59 = math.rsqrt %58 : vector<16x1xf32>
    %60 = vector.broadcast %56 : f32 to vector<16x1xf32>
    %61 = arith.mulf %60, %59 : vector<16x1xf32>
    %62 = vector.broadcast %61 : vector<16x1xf32> to vector<16x256xf32>
    %63 = arith.mulf %62, %50 : vector<16x256xf32>
    %64 = arith.addf %41, %63 : vector<16x256xf32>
    %c2 = arith.constant 2 : index
    %c0_19 = arith.constant 0 : index
    %c0_20 = arith.constant 0 : index
    %65 = vector.load %arg3[%c2, %c0_19, %c0_20] : memref<4x256x256xf32, #tpu.memory_space<vmem>>, vector<1x256x256xf32>
    %66 = vector.shape_cast %65 : vector<1x256x256xf32> to vector<256x256xf32>
    %cst_21 = arith.constant dense<0.000000e+00> : vector<16x256xf32>
    %67 = tpu.matmul %11, %66, %cst_21 {dimension_numbers = #tpu.dot_dimension_numbers<[1], [0], [0], [1], [0, 0, 1, 1], [], []>} : vector<16x256xf32>, vector<256x256xf32>, vector<16x256xf32> -> vector<16x256xf32>
    %cst_22 = arith.constant dense<0.000000e+00> : vector<16xf32>
    %68 = vector.multi_reduction <add>, %67, %cst_22 [1] : vector<16x256xf32> to vector<16xf32>
    %69 = vector.shape_cast %68 : vector<16xf32> to vector<16x1xf32>
    %cst_23 = arith.constant 2.560000e+02 : f32
    %70 = vector.broadcast %cst_23 : f32 to vector<16x1xf32>
    %71 = arith.divf %69, %70 : vector<16x1xf32>
    %72 = vector.broadcast %71 : vector<16x1xf32> to vector<16x256xf32>
    %73 = arith.subf %67, %72 : vector<16x256xf32>
    %74 = arith.mulf %73, %73 : vector<16x256xf32>
    %cst_24 = arith.constant dense<0.000000e+00> : vector<16xf32>
    %75 = vector.multi_reduction <add>, %74, %cst_24 [1] : vector<16x256xf32> to vector<16xf32>
    %76 = vector.shape_cast %75 : vector<16xf32> to vector<16x1xf32>
    %cst_25 = arith.constant 2.560000e+02 : f32
    %77 = vector.broadcast %cst_25 : f32 to vector<16x1xf32>
    %78 = arith.divf %76, %77 : vector<16x1xf32>
    %c2_26 = arith.constant 2 : index
    %79 = memref.load %arg1[%c2_26] : memref<4xf32, #tpu.memory_space<smem>>
    %cst_27 = arith.constant 9.99999974E-6 : f32
    %80 = vector.broadcast %cst_27 : f32 to vector<16x1xf32>
    %81 = arith.addf %78, %80 : vector<16x1xf32>
    %82 = math.rsqrt %81 : vector<16x1xf32>
    %83 = vector.broadcast %79 : f32 to vector<16x1xf32>
    %84 = arith.mulf %83, %82 : vector<16x1xf32>
    %85 = vector.broadcast %84 : vector<16x1xf32> to vector<16x256xf32>
    %86 = arith.mulf %85, %73 : vector<16x256xf32>
    %87 = arith.addf %64, %86 : vector<16x256xf32>
    %c3 = arith.constant 3 : index
    %c0_28 = arith.constant 0 : index
    %c0_29 = arith.constant 0 : index
    %88 = vector.load %arg3[%c3, %c0_28, %c0_29] : memref<4x256x256xf32, #tpu.memory_space<vmem>>, vector<1x256x256xf32>
    %89 = vector.shape_cast %88 : vector<1x256x256xf32> to vector<256x256xf32>
    %cst_30 = arith.constant dense<0.000000e+00> : vector<16x256xf32>
    %90 = tpu.matmul %19, %89, %cst_30 {dimension_numbers = #tpu.dot_dimension_numbers<[1], [0], [0], [1], [0, 0, 1, 1], [], []>} : vector<16x256xf32>, vector<256x256xf32>, vector<16x256xf32> -> vector<16x256xf32>
    %cst_31 = arith.constant dense<0.000000e+00> : vector<16xf32>
    %91 = vector.multi_reduction <add>, %90, %cst_31 [1] : vector<16x256xf32> to vector<16xf32>
    %92 = vector.shape_cast %91 : vector<16xf32> to vector<16x1xf32>
    %cst_32 = arith.constant 2.560000e+02 : f32
    %93 = vector.broadcast %cst_32 : f32 to vector<16x1xf32>
    %94 = arith.divf %92, %93 : vector<16x1xf32>
    %95 = vector.broadcast %94 : vector<16x1xf32> to vector<16x256xf32>
    %96 = arith.subf %90, %95 : vector<16x256xf32>
    %97 = arith.mulf %96, %96 : vector<16x256xf32>
    %cst_33 = arith.constant dense<0.000000e+00> : vector<16xf32>
    %98 = vector.multi_reduction <add>, %97, %cst_33 [1] : vector<16x256xf32> to vector<16xf32>
    %99 = vector.shape_cast %98 : vector<16xf32> to vector<16x1xf32>
    %cst_34 = arith.constant 2.560000e+02 : f32
    %100 = vector.broadcast %cst_34 : f32 to vector<16x1xf32>
    %101 = arith.divf %99, %100 : vector<16x1xf32>
    %c3_35 = arith.constant 3 : index
    %102 = memref.load %arg1[%c3_35] : memref<4xf32, #tpu.memory_space<smem>>
    %cst_36 = arith.constant 9.99999974E-6 : f32
    %103 = vector.broadcast %cst_36 : f32 to vector<16x1xf32>
    %104 = arith.addf %101, %103 : vector<16x1xf32>
    %105 = math.rsqrt %104 : vector<16x1xf32>
    %106 = vector.broadcast %102 : f32 to vector<16x1xf32>
    %107 = arith.mulf %106, %105 : vector<16x1xf32>
    %108 = vector.broadcast %107 : vector<16x1xf32> to vector<16x256xf32>
    %109 = arith.mulf %108, %96 : vector<16x256xf32>
    %110 = arith.addf %87, %109 : vector<16x256xf32>
    %c0_37 = arith.constant 0 : index
    %111 = memref.load %arg2[%c0_37] : memref<1xf32, #tpu.memory_space<smem>>
    %112 = vector.broadcast %111 : f32 to vector<16x256xf32>
    %113 = arith.addf %110, %112 : vector<16x256xf32>
    %c0_38 = arith.constant 0 : index
    %c0_39 = arith.constant 0 : index
    %114 = vector.load %arg5[%c0_38, %c0_39] : memref<16x256xf32, #tpu.memory_space<vmem>>, vector<16x256xf32>
    tpu.vector_store %arg5[%c0_38, %c0_39], %113 {strides = array<i32>} : memref<16x256xf32, #tpu.memory_space<vmem>>, vector<16x256xf32>,
    return
  }
  func.func @transform_0(%arg0: i32) -> i32 {
    %c0_i32 = arith.constant 0 : i32
    %c0_i32_0 = arith.constant 0 : i32
    return %c0_i32 : i32
  }
  func.func @transform_1(%arg0: i32) -> i32 {
    %c0_i32 = arith.constant 0 : i32
    %c0_i32_0 = arith.constant 0 : i32
    return %c0_i32 : i32
  }
  func.func @transform_2(%arg0: i32) -> (i32, i32, i32) {
    %c0_i32 = arith.constant 0 : i32
    %c0_i32_0 = arith.constant 0 : i32
    %c0_i32_1 = arith.constant 0 : i32
    %c0_i32_2 = arith.constant 0 : i32
    return %c0_i32, %c0_i32_0, %c0_i32_1 : i32, i32, i32
  }
  func.func @transform_3(%arg0: i32) -> (i32, i32) {
    %c0_i32 = arith.constant 0 : i32
    %c0_i32_0 = arith.constant 0 : i32
    return %arg0, %c0_i32 : i32, i32
  }
  func.func @transform_4(%arg0: i32) -> (i32, i32) {
    %c0_i32 = arith.constant 0 : i32
    %c0_i32_0 = arith.constant 0 : i32
    return %arg0, %c0_i32 : i32, i32
  }
}

</mosaic_0001>

<llo_original>
// kernel: tpu_custom_call.1
$region0: #{tpu_custom_call.1}
  #allocation0 [shape = 'u32[]', space=smem, size = 0x4, offset = 0x4, fixed_abs, tag = 'smem constant byte address 0x4 - core index']
  #allocation1 [shape = 'u32[72,128]{1,0:T(1,128)}', space=vmem, size = 0x9000, scoped, tag = 'internal scratch']
  #allocation2 [shape = 'f32[1]{0:T(128)S(6)}', space=smem, size = 0x200, scoped, tag = 'scoped memory for tpu_custom_call.1']
  %s0 = inlined_call_operand.vmem [shape: f32[4], index: 0, kind: input, shape index: {}]
  %s1 = inlined_call_operand.<no memory space> [shape: f32[1], index: 1, kind: input, shape index: {}]
  %s2 = inlined_call_operand.hbm [shape: f32[4,256,256], index: 2, kind: input, shape index: {}]
  %s3 = inlined_call_operand.hbm [shape: f32[16,264], index: 3, kind: input, shape index: {}]
  %s4 = inlined_call_operand.hbm [shape: f32[16,256], index: 4, kind: output, shape index: {}]
  %s5 = sld [smem:[#allocation0]]
  $region38: #{tpu_custom_call.1} parent=0
    _
  %s7 = ssub.s32 1, %s5
  %s8 = scalar_select 0, %s7, %s5
  %9 = sst [smem:[#allocation2]] %s1
  $region1: #{tpu_custom_call.1} parent=0
    #allocation3 [shape = 'u8[512]{0}', space=smem, size = 0x200, scoped, tag = 'input window, operand 0, single buffered']
    #allocation4 [shape = 's32[1]{0}', space=sflag, size = 0x4, scoped, tag = 'scoped memory for tpu_custom_call.1']
    #allocation5 [shape = 's32[1]{0}', space=sflag, size = 0x4, scoped, tag = 'scoped memory for tpu_custom_call.1']
    #allocation6 [shape = 's32[1]{0}', space=sflag, size = 0x4, scoped, tag = 'scoped memory for tpu_custom_call.1']
    #allocation7 [shape = 'u8[1048576]{0}', space=vmem, size = 0x100000, scoped, tag = 'input window, operand 2, single buffered']
    #allocation8 [shape = 'u8[24576]{0}', space=vmem, size = 0x6000, scoped, tag = 'input window, operand 3, single buffered']
    #allocation9 [shape = 's32[1]{0}', space=sflag, size = 0x4, scoped, tag = 'scoped memory for tpu_custom_call.1']
    #allocation10 [shape = 'u8[16384]{0}', space=vmem, size = 0x4000, scoped, tag = 'output window, operand 0, single buffered']
    %10 = vsyncpa [#allocation6], 0
    %11 = vsyncpa [#allocation4], 0
    %12 = vsyncpa [#allocation9], 0
    %13 = vsyncpa [#allocation5], 0
    // Predicated region
    $region2: #{tpu_custom_call.1} parent=1 // pred_check
      _
    $region3: #{tpu_custom_call.1} parent=1 // pred_check_branch
      %15 = sbr.rel (0) target = $region5
    $region4: #{tpu_custom_call.1} parent=1 // pred_region
      %17 = vsyncadd [#allocation6], 0
      %s19 = sshll.u32 %s0, 4
      %s20 = int_to_ptr.vmem [resolvable:$true] %s19
      %22 = dma.vmem_to_smem %s20, 16, [#allocation3], [#allocation6]
    $region5: #{tpu_custom_call.1} parent=1 // pred_fallthru
      _
    // Predicated region
    $region6: #{tpu_custom_call.1} parent=1 // pred_check
      _
    $region7: #{tpu_custom_call.1} parent=1 // pred_check_branch
      %24 = sbr.rel (0) target = $region9
    $region8: #{tpu_custom_call.1} parent=1 // pred_region
      _
    $region9: #{tpu_custom_call.1} parent=1 // pred_fallthru
      _
    // Predicated region
    $region10: #{tpu_custom_call.1} parent=1 // pred_check
      _
    $region11: #{tpu_custom_call.1} parent=1 // pred_check_branch
      %26 = sbr.rel (0) target = $region13
    $region12: #{tpu_custom_call.1} parent=1 // pred_region
      %28 = vsyncadd [#allocation4], 0
      %s29 = sshll.u32 %s2, 4
      %s30 = int_to_ptr.hbm [resolvable:$true] %s29
      %s31 = sshll.u32 [#allocation7], 4
      %s32 = int_to_ptr.vmem [resolvable:$true] %s31
      %37 = dma.hbm_to_vmem [thread:$0]  %s30, 32768, %s32, [#allocation4], 256, 256, 16
    $region13: #{tpu_custom_call.1} parent=1 // pred_fallthru
      _
    // Predicated region
    $region14: #{tpu_custom_call.1} parent=1 // pred_check
      _
    $region15: #{tpu_custom_call.1} parent=1 // pred_check_branch
      %39 = sbr.rel (0) target = $region17
    $region16: #{tpu_custom_call.1} parent=1 // pred_region
      %41 = vsyncadd [#allocation9], 0
      %s42 = sshll.u32 %s3, 4
      %s43 = int_to_ptr.hbm [resolvable:$true] %s42
      %s44 = sshll.u32 [#allocation8], 4
      %s45 = int_to_ptr.vmem [resolvable:$true] %s44
      %50 = dma.hbm_to_vmem [thread:$0]  %s43, 768, %s45, [#allocation9], 384, 384, 24
    $region17: #{tpu_custom_call.1} parent=1 // pred_fallthru
      _
    // Predicated region
    $region18: #{tpu_custom_call.1} parent=1 // pred_check
      _
    $region19: #{tpu_custom_call.1} parent=1 // pred_check_branch
      %52 = sbr.rel (0) target = $region21
    $region20: #{tpu_custom_call.1} parent=1 // pred_region
      %54 = dma.done [#allocation6], 16
    $region21: #{tpu_custom_call.1} parent=1 // pred_fallthru
      _
    // Predicated region
    $region22: #{tpu_custom_call.1} parent=1 // pred_check
      _
    $region23: #{tpu_custom_call.1} parent=1 // pred_check_branch
      %56 = sbr.rel (0) target = $region25
    $region24: #{tpu_custom_call.1} parent=1 // pred_region
      %58 = dma.done [#allocation4], 32768
    $region25: #{tpu_custom_call.1} parent=1 // pred_fallthru
      _
    // Predicated region
    $region26: #{tpu_custom_call.1} parent=1 // pred_check
      _
    $region27: #{tpu_custom_call.1} parent=1 // pred_check_branch
      %60 = sbr.rel (0) target = $region29
    $region28: #{tpu_custom_call.1} parent=1 // pred_region
      %62 = dma.done [#allocation9], 768
    $region29: #{tpu_custom_call.1} parent=1 // pred_fallthru
      _
    %63 = sfence
    %v64 = vld [vmem:[#allocation8] sm:$0xff]
    %v65 = vld [vmem:[#allocation8 + $0x8] sm:$0xff]
    %v66 = vld [vmem:[#allocation8 + $0x10] sm:$0xff]
    %v67 = vld [vmem:[#allocation8 + $0x18] sm:$0xff]
    %v68 = vld [vmem:[#allocation8 + $0x20] sm:$0xff]
    %v69 = vld [vmem:[#allocation8 + $0x28] sm:$0xff]
    %v70 = vand.u32 2147483647, %v64
    %v71 = vand.u32 2147483647, %v65
    %v72 = vand.u32 2147483647, %v66
    %v73 = vand.u32 2147483647, %v67
    %v74 = vand.u32 2147483647, %v68
    %v75 = vand.u32 2147483647, %v69
    %82 = vrot.lane.b32.xlu0 %v70, 126
    %v83 = vpop.permute.xlu0 %82
    %84 = vrot.lane.b32.xlu0 %v71, 126
    %v85 = vpop.permute.xlu0 %84
    %86 = vrot.lane.b32.xlu0 %v72, 126
    %v87 = vpop.permute.xlu0 %86
    %88 = vrot.lane.b32.xlu0 %v73, 126
    %v89 = vpop.permute.xlu0 %88
    %90 = vrot.lane.b32.xlu0 %v74, 126
    %v91 = vpop.permute.xlu0 %90
    %92 = vrot.lane.b32.xlu0 %v75, 126
    %v93 = vpop.permute.xlu0 %92
    %vm94 = vcmask 1031168
    %v95 = vsel %vm94, %v83, %v85
    %v96 = vsel %vm94, %v85, %v87
    %v97 = vsel %vm94, %v89, %v91
    %v98 = vsel %vm94, %v91, %v93
    %v105 = vmax.f32 %v70, %v95
    %v106 = vmax.f32 %v71, %v96
    %v107 = vmax.f32 %v72, %v87
    %v108 = vmax.f32 %v73, %v97
    %v109 = vmax.f32 %v74, %v98
    %v110 = vmax.f32 %v75, %v93
    %111 = vrot.lane.b32.xlu0 %v70, 127
    %v112 = vpop.permute.xlu0 %111
    %113 = vrot.lane.b32.xlu0 %v71, 127
    %v114 = vpop.permute.xlu0 %113
    %115 = vrot.lane.b32.xlu0 %v72, 127
    %v116 = vpop.permute.xlu0 %115
    %117 = vrot.lane.b32.xlu0 %v73, 127
    %v118 = vpop.permute.xlu0 %117
    %119 = vrot.lane.b32.xlu0 %v74, 127
    %v120 = vpop.permute.xlu0 %119
    %121 = vrot.lane.b32.xlu0 %v75, 127
    %v122 = vpop.permute.xlu0 %121
    %vm123 = vcmask 1039360
    %v124 = vsel %vm123, %v112, %v114
    %v125 = vsel %vm123, %v114, %v116
    %v126 = vsel %vm123, %v118, %v120
    %v127 = vsel %vm123, %v120, %v122
    %v134 = vmax.f32 %v105, %v124
    %v135 = vmax.f32 %v106, %v125
    %v136 = vmax.f32 %v107, %v116
    %v137 = vmax.f32 %v108, %v126
    %v138 = vmax.f32 %v109, %v127
    %v139 = vmax.f32 %v110, %v122
    %140 = vrot.lane.b32.xlu0 %v70, 124
    %v141 = vpop.permute.xlu0 %140
    %142 = vrot.lane.b32.xlu0 %v71, 124
    %v143 = vpop.permute.xlu0 %142
    %144 = vrot.lane.b32.xlu0 %v72, 124
    %v145 = vpop.permute.xlu0 %144
    %146 = vrot.lane.b32.xlu0 %v73, 124
    %v147 = vpop.permute.xlu0 %146
    %148 = vrot.lane.b32.xlu0 %v74, 124
    %v149 = vpop.permute.xlu0 %148
    %150 = vrot.lane.b32.xlu0 %v75, 124
    %v151 = vpop.permute.xlu0 %150
    %vm152 = vcmask 1014784
    %v153 = vsel %vm152, %v141, %v143
    %v154 = vsel %vm152, %v143, %v145
    %v155 = vsel %vm152, %v147, %v149
    %v156 = vsel %vm152, %v149, %v151
    %v163 = vmax.f32 %v70, %v153
    %v164 = vmax.f32 %v71, %v154
    %v165 = vmax.f32 %v72, %v145
    %v166 = vmax.f32 %v73, %v155
    %v167 = vmax.f32 %v74, %v156
    %v168 = vmax.f32 %v75, %v151
    %175 = vrot.lane.b32.xlu0 %v134, 127
    %v176 = vpop.permute.xlu0 %175
    %177 = vrot.lane.b32.xlu0 %v135, 127
    %v178 = vpop.permute.xlu0 %177
    %179 = vrot.lane.b32.xlu0 %v136, 127
    %v180 = vpop.permute.xlu0 %179
    %181 = vrot.lane.b32.xlu0 %v137, 127
    %v182 = vpop.permute.xlu0 %181
    %183 = vrot.lane.b32.xlu0 %v138, 127
    %v184 = vpop.permute.xlu0 %183
    %185 = vrot.lane.b32.xlu0 %v139, 127
    %v186 = vpop.permute.xlu0 %185
    %v187 = vsel %vm123, %v176, %v178
    %v188 = vsel %vm123, %v178, %v180
    %v189 = vsel %vm123, %v182, %v184
    %v190 = vsel %vm123, %v184, %v186
    %v197 = vmax.f32 %v163, %v187
    %v198 = vmax.f32 %v164, %v188
    %v199 = vmax.f32 %v165, %v180
    %v200 = vmax.f32 %v166, %v189
    %v201 = vmax.f32 %v167, %v190
    %v202 = vmax.f32 %v168, %v186
    %203 = vrot.lane.b32.xlu0 %v70, 122
    %v204 = vpop.permute.xlu0 %203
    %205 = vrot.lane.b32.xlu0 %v71, 122
    %v206 = vpop.permute.xlu0 %205
    %207 = vrot.lane.b32.xlu0 %v72, 122
    %v208 = vpop.permute.xlu0 %207
    %209 = vrot.lane.b32.xlu0 %v73, 122
    %v210 = vpop.permute.xlu0 %209
    %211 = vrot.lane.b32.xlu0 %v74, 122
    %v212 = vpop.permute.xlu0 %211
    %213 = vrot.lane.b32.xlu0 %v75, 122
    %v214 = vpop.permute.xlu0 %213
    %vm215 = vcmask 998400
    %v216 = vsel %vm215, %v204, %v206
    %v217 = vsel %vm215, %v206, %v208
    %v218 = vsel %vm215, %v210, %v212
    %v219 = vsel %vm215, %v212, %v214
    %v226 = vmax.f32 %v70, %v216
    %v227 = vmax.f32 %v71, %v217
    %v228 = vmax.f32 %v72, %v208
    %v229 = vmax.f32 %v73, %v218
    %v230 = vmax.f32 %v74, %v219
    %v231 = vmax.f32 %v75, %v214
    %238 = vrot.lane.b32.xlu0 %v197, 127
    %v239 = vpop.permute.xlu0 %238
    %240 = vrot.lane.b32.xlu0 %v198, 127
    %v241 = vpop.permute.xlu0 %240
    %242 = vrot.lane.b32.xlu0 %v199, 127
    %v243 = vpop.permute.xlu0 %242
    %244 = vrot.lane.b32.xlu0 %v200, 127
    %v245 = vpop.permute.xlu0 %244
    %246 = vrot.lane.b32.xlu0 %v201, 127
    %v247 = vpop.permute.xlu0 %246
    %248 = vrot.lane.b32.xlu0 %v202, 127
    %v249 = vpop.permute.xlu0 %248
    %v250 = vsel %vm123, %v239, %v241
    %v251 = vsel %vm123, %v241, %v243
    %v252 = vsel %vm123, %v245, %v247
    %v253 = vsel %vm123, %v247, %v249
    %v260 = vmax.f32 %v226, %v250
    %v261 = vmax.f32 %v227, %v251
    %v262 = vmax.f32 %v228, %v243
    %v263 = vmax.f32 %v229, %v252
    %v264 = vmax.f32 %v230, %v253
    %v265 = vmax.f32 %v231, %v249
    %266 = vrot.lane.b32.xlu0 %v70, 120
    %v267 = vpop.permute.xlu0 %266
    %268 = vrot.lane.b32.xlu0 %v71, 120
    %v269 = vpop.permute.xlu0 %268
    %270 = vrot.lane.b32.xlu0 %v72, 120
    %v271 = vpop.permute.xlu0 %270
    %272 = vrot.lane.b32.xlu0 %v73, 120
    %v273 = vpop.permute.xlu0 %272
    %274 = vrot.lane.b32.xlu0 %v74, 120
    %v275 = vpop.permute.xlu0 %274
    %276 = vrot.lane.b32.xlu0 %v75, 120
    %v277 = vpop.permute.xlu0 %276
    %vm278 = vcmask 982016
    %v279 = vsel %vm278, %v267, %v269
    %v280 = vsel %vm278, %v269, %v271
    %v281 = vsel %vm278, %v273, %v275
    %v282 = vsel %vm278, %v275, %v277
    %v287 = vmax.f32 %v70, %v279
    %v288 = vmax.f32 %v71, %v280
    %v289 = vmax.f32 %v73, %v281
    %v290 = vmax.f32 %v74, %v282
    %297 = vrot.lane.b32.xlu0 %v260, 127
    %v298 = vpop.permute.xlu0 %297
    %299 = vrot.lane.b32.xlu0 %v261, 127
    %v300 = vpop.permute.xlu0 %299
    %301 = vrot.lane.b32.xlu0 %v262, 127
    %v302 = vpop.permute.xlu0 %301
    %303 = vrot.lane.b32.xlu0 %v263, 127
    %v304 = vpop.permute.xlu0 %303
    %305 = vrot.lane.b32.xlu0 %v264, 127
    %v306 = vpop.permute.xlu0 %305
    %307 = vrot.lane.b32.xlu0 %v265, 127
    %v308 = vpop.permute.xlu0 %307
    %v309 = vsel %vm123, %v298, %v300
    %v310 = vsel %vm123, %v300, %v302
    %v311 = vsel %vm123, %v304, %v306
    %v312 = vsel %vm123, %v306, %v308
    %v317 = vmax.f32 %v287, %v309
    %v318 = vmax.f32 %v288, %v310
    %v319 = vmax.f32 %v289, %v311
    %v320 = vmax.f32 %v290, %v312
    %v321 = vld [vmem:[#allocation7] sm:$0xff]
    %v322 = vld [vmem:[#allocation7 + $0x8] sm:$0xff]
    %v323 = vld [vmem:[#allocation7 + $0x10] sm:$0xff]
    %v324 = vld [vmem:[#allocation7 + $0x18] sm:$0xff]
    %v325 = vld [vmem:[#allocation7 + $0x20] sm:$0xff]
    %v326 = vld [vmem:[#allocation7 + $0x28] sm:$0xff]
    %v327 = vld [vmem:[#allocation7 + $0x30] sm:$0xff]
    %v328 = vld [vmem:[#allocation7 + $0x38] sm:$0xff]
    %v329 = vld [vmem:[#allocation7 + $0x40] sm:$0xff]
    %v330 = vld [vmem:[#allocation7 + $0x48] sm:$0xff]
    %v331 = vld [vmem:[#allocation7 + $0x50] sm:$0xff]
    %v332 = vld [vmem:[#allocation7 + $0x58] sm:$0xff]
    %v333 = vld [vmem:[#allocation7 + $0x60] sm:$0xff]
    %v334 = vld [vmem:[#allocation7 + $0x68] sm:$0xff]
    %v335 = vld [vmem:[#allocation7 + $0x70] sm:$0xff]
    %v336 = vld [vmem:[#allocation7 + $0x78] sm:$0xff]
    %v337 = vld [vmem:[#allocation7 + $0x80] sm:$0xff]
    %v338 = vld [vmem:[#allocation7 + $0x88] sm:$0xff]
    %v339 = vld [vmem:[#allocation7 + $0x90] sm:$0xff]
    %v340 = vld [vmem:[#allocation7 + $0x98] sm:$0xff]
    %v341 = vld [vmem:[#allocation7 + $0xa0] sm:$0xff]
    %v342 = vld [vmem:[#allocation7 + $0xa8] sm:$0xff]
    %v343 = vld [vmem:[#allocation7 + $0xb0] sm:$0xff]
    %v344 = vld [vmem:[#allocation7 + $0xb8] sm:$0xff]
    %v345 = vld [vmem:[#allocation7 + $0xc0] sm:$0xff]
    %v346 = vld [vmem:[#allocation7 + $0xc8] sm:$0xff]
    %v347 = vld [vmem:[#allocation7 + $0xd0] sm:$0xff]
    %v348 = vld [vmem:[#allocation7 + $0xd8] sm:$0xff]
    %v349 = vld [vmem:[#allocation7 + $0xe0] sm:$0xff]
    %v350 = vld [vmem:[#allocation7 + $0xe8] sm:$0xff]
    %v351 = vld [vmem:[#allocation7 + $0xf0] sm:$0xff]
    %v352 = vld [vmem:[#allocation7 + $0xf8] sm:$0xff]
    %v353 = vld [vmem:[#allocation7 + $0x100] sm:$0xff]
    %v354 = vld [vmem:[#allocation7 + $0x108] sm:$0xff]
    %v355 = vld [vmem:[#allocation7 + $0x110] sm:$0xff]
    %v356 = vld [vmem:[#allocation7 + $0x118] sm:$0xff]
    %v357 = vld [vmem:[#allocation7 + $0x120] sm:$0xff]
    %v358 = vld [vmem:[#allocation7 + $0x128] sm:$0xff]
    %v359 = vld [vmem:[#allocation7 + $0x130] sm:$0xff]
    %v360 = vld [vmem:[#allocation7 + $0x138] sm:$0xff]
    %v361 = vld [vmem:[#allocation7 + $0x140] sm:$0xff]
    %v362 = vld [vmem:[#allocation7 + $0x148] sm:$0xff]
    %v363 = vld [vmem:[#allocation7 + $0x150] sm:$0xff]
    %v364 = vld [vmem:[#allocation7 + $0x158] sm:$0xff]
    %v365 = vld [vmem:[#allocation7 + $0x160] sm:$0xff]
    %v366 = vld [vmem:[#allocation7 + $0x168] sm:$0xff]
    %v367 = vld [vmem:[#allocation7 + $0x170] sm:$0xff]
    %v368 = vld [vmem:[#allocation7 + $0x178] sm:$0xff]
    %v369 = vld [vmem:[#allocation7 + $0x180] sm:$0xff]
    %v370 = vld [vmem:[#allocation7 + $0x188] sm:$0xff]
    %v371 = vld [vmem:[#allocation7 + $0x190] sm:$0xff]
    %v372 = vld [vmem:[#allocation7 + $0x198] sm:$0xff]
    %v373 = vld [vmem:[#allocation7 + $0x1a0] sm:$0xff]
    %v374 = vld [vmem:[#allocation7 + $0x1a8] sm:$0xff]
    %v375 = vld [vmem:[#allocation7 + $0x1b0] sm:$0xff]
    %v376 = vld [vmem:[#allocation7 + $0x1b8] sm:$0xff]
    %v377 = vld [vmem:[#allocation7 + $0x1c0] sm:$0xff]
    %v378 = vld [vmem:[#allocation7 + $0x1c8] sm:$0xff]
    %v379 = vld [vmem:[#allocation7 + $0x1d0] sm:$0xff]
    %v380 = vld [vmem:[#allocation7 + $0x1d8] sm:$0xff]
    %v381 = vld [vmem:[#allocation7 + $0x1e0] sm:$0xff]
    %v382 = vld [vmem:[#allocation7 + $0x1e8] sm:$0xff]
    %v383 = vld [vmem:[#allocation7 + $0x1f0] sm:$0xff]
    %v384 = vld [vmem:[#allocation7 + $0x1f8] sm:$0xff]
    %391 = vrot.lane.b32.xlu0 %v64, 124
    %v392 = vpop.permute.xlu0 %391
    %393 = vrot.lane.b32.xlu0 %v65, 124
    %v394 = vpop.permute.xlu0 %393
    %395 = vrot.lane.b32.xlu0 %v66, 124
    %v396 = vpop.permute.xlu0 %395
    %397 = vrot.lane.b32.xlu0 %v67, 124
    %v398 = vpop.permute.xlu0 %397
    %399 = vrot.lane.b32.xlu0 %v68, 124
    %v400 = vpop.permute.xlu0 %399
    %401 = vrot.lane.b32.xlu0 %v69, 124
    %v402 = vpop.permute.xlu0 %401
    %v403 = vsel %vm152, %v392, %v394
    %v404 = vsel %vm152, %v394, %v396
    %v405 = vsel %vm152, %v398, %v400
    %v406 = vsel %vm152, %v400, %v402
    %411 = vmatpush.msra.mxu0 %v351
    %412 = vmatpush.msra.mxu0 %v349
    %413 = vmatpush.msra.mxu0 %v347
    %414 = vmatpush.msra.mxu0 %v345
    %415 = vmatpush.msra.mxu0 %v343
    %416 = vmatpush.msra.mxu0 %v341
    %417 = vmatpush.msra.mxu0 %v339
    %418 = vmatpush.msra.mxu0 %v337
    %419 = vmatpush.msra.mxu0 %v335
    %420 = vmatpush.msra.mxu0 %v333
    %421 = vmatpush.msra.mxu0 %v331
    %422 = vmatpush.msra.mxu0 %v329
    %423 = vmatpush.msra.mxu0 %v327
    %424 = vmatpush.msra.mxu0 %v325
    %425 = vmatpush.msra.mxu0 %v323
    %426 = vmatpush.msra.mxu0 %v321
    %427 = vmatmul.f32.gmra.mxu0 %v403
    %v428 = vpop.f32.mrf.mxu0
    %v429 = vadd.f32 0.0, %v428
    %430 = vmatmul.f32.gmra.mxu0 %v405
    %v431 = vpop.f32.mrf.mxu0
    %v432 = vadd.f32 0.0, %v431
    %433 = vdwg.mxu0
    %434 = vmatpush.msra.mxu0 %v383
    %435 = vmatpush.msra.mxu0 %v381
    %436 = vmatpush.msra.mxu0 %v379
    %437 = vmatpush.msra.mxu0 %v377
    %438 = vmatpush.msra.mxu0 %v375
    %439 = vmatpush.msra.mxu0 %v373
    %440 = vmatpush.msra.mxu0 %v371
    %441 = vmatpush.msra.mxu0 %v369
    %442 = vmatpush.msra.mxu0 %v367
    %443 = vmatpush.msra.mxu0 %v365
    %444 = vmatpush.msra.mxu0 %v363
    %445 = vmatpush.msra.mxu0 %v361
    %446 = vmatpush.msra.mxu0 %v359
    %447 = vmatpush.msra.mxu0 %v357
    %448 = vmatpush.msra.mxu0 %v355
    %449 = vmatpush.msra.mxu0 %v353
    %450 = vmatmul.f32.gmra.mxu0 %v404
    %v451 = vpop.f32.mrf.mxu0
    %v452 = vadd.f32 %v429, %v451
    %453 = vmatmul.f32.gmra.mxu0 %v406
    %v454 = vpop.f32.mrf.mxu0
    %v455 = vadd.f32 %v432, %v454
    %456 = vdwg.mxu0
    %457 = vmatpush.msra.mxu0 %v352
    %458 = vmatpush.msra.mxu0 %v350
    %459 = vmatpush.msra.mxu0 %v348
    %460 = vmatpush.msra.mxu0 %v346
    %461 = vmatpush.msra.mxu0 %v344
    %462 = vmatpush.msra.mxu0 %v342
    %463 = vmatpush.msra.mxu0 %v340
    %464 = vmatpush.msra.mxu0 %v338
    %465 = vmatpush.msra.mxu0 %v336
    %466 = vmatpush.msra.mxu0 %v334
    %467 = vmatpush.msra.mxu0 %v332
    %468 = vmatpush.msra.mxu0 %v330
    %469 = vmatpush.msra.mxu0 %v328
    %470 = vmatpush.msra.mxu0 %v326
    %471 = vmatpush.msra.mxu0 %v324
    %472 = vmatpush.msra.mxu0 %v322
    %473 = vmatmul.f32.gmra.mxu0 %v403
    %v474 = vpop.f32.mrf.mxu0
    %v475 = vadd.f32 0.0, %v474
    %476 = vmatmul.f32.gmra.mxu0 %v405
    %v477 = vpop.f32.mrf.mxu0
    %v478 = vadd.f32 0.0, %v477
    %479 = vdwg.mxu0
    %480 = vmatpush.msra.mxu0 %v384
    %481 = vmatpush.msra.mxu0 %v382
    %482 = vmatpush.msra.mxu0 %v380
    %483 = vmatpush.msra.mxu0 %v378
    %484 = vmatpush.msra.mxu0 %v376
    %485 = vmatpush.msra.mxu0 %v374
    %486 = vmatpush.msra.mxu0 %v372
    %487 = vmatpush.msra.mxu0 %v370
    %488 = vmatpush.msra.mxu0 %v368
    %489 = vmatpush.msra.mxu0 %v366
    %490 = vmatpush.msra.mxu0 %v364
    %491 = vmatpush.msra.mxu0 %v362
    %492 = vmatpush.msra.mxu0 %v360
    %493 = vmatpush.msra.mxu0 %v358
    %494 = vmatpush.msra.mxu0 %v356
    %495 = vmatpush.msra.mxu0 %v354
    %496 = vmatmul.f32.gmra.mxu0 %v404
    %v497 = vpop.f32.mrf.mxu0
    %v498 = vadd.f32 %v475, %v497
    %499 = vmatmul.f32.gmra.mxu0 %v406
    %v500 = vpop.f32.mrf.mxu0
    %v501 = vadd.f32 %v478, %v500
    %502 = vdwg.mxu0
    %v503 = vadd.f32 %v452, %v498
    %504 = vadd.xlane.f32.xlu0 %v503
    %v505 = vpop.xlane.xlu0 %504
    %v506 = vadd.f32 %v455, %v501
    %507 = vadd.xlane.f32.xlu0 %v506
    %v508 = vpop.xlane.xlu0 %507
    %v509 = vrcp.pop 256.0
    %v510 = vmul.f32 256.0, %v509
    %v511 = vsub.f32 1.0, %v510
    %v512 = vmul.f32 %v509, %v511
    %v513 = vadd.f32 %v509, %v512
    %vm514 = vweird.f32 %v509
    %v515 = vsel %vm514, %v509, %v513
    %v516 = vmul.f32 %v505, %v515
    %v517 = vmul.f32 %v508, %v515
    %v518 = vsub.f32 %v452, %v516
    %v519 = vsub.f32 %v498, %v516
    %v520 = vsub.f32 %v455, %v517
    %v521 = vsub.f32 %v501, %v517
    %v522 = vmul.f32 %v518, %v518
    %v523 = vmul.f32 %v519, %v519
    %v524 = vmul.f32 %v520, %v520
    %v525 = vmul.f32 %v521, %v521
    %v526 = vadd.f32 %v522, %v523
    %527 = vadd.xlane.f32.xlu0 %v526
    %v528 = vpop.xlane.xlu0 %527
    %v529 = vadd.f32 %v524, %v525
    %530 = vadd.xlane.f32.xlu0 %v529
    %v531 = vpop.xlane.xlu0 %530
    %v532 = vmul.f32 %v528, %v515
    %v533 = vmul.f32 %v531, %v515
    %s534 = sld [smem:[#allocation3]]
    %v535 = vadd.f32 %v532, 1e-05
    %v536 = vadd.f32 %v533, 1e-05
    %v537 = vrsqrt.pop %v535
    %v538 = vmul.f32 %v537, %v535
    %v539 = vmul.f32 %v538, %v537
    %v540 = vmul.f32 0.5, %v539
    %v541 = vsub.f32 1.5, %v540
    %v542 = vmul.f32 %v537, %v541
    %vm543 = vweird.f32 %v535
    %vm544 = vweird.f32 %v537
    %vm545 = vmor %vm543, %vm544
    %v546 = vsel %vm545, %v537, %v542
    %v547 = vrsqrt.pop %v536
    %v548 = vmul.f32 %v547, %v536
    %v549 = vmul.f32 %v548, %v547
    %v550 = vmul.f32 0.5, %v549
    %v551 = vsub.f32 1.5, %v550
    %v552 = vmul.f32 %v547, %v551
    %vm553 = vweird.f32 %v536
    %vm554 = vweird.f32 %v547
    %vm555 = vmor %vm553, %vm554
    %v556 = vsel %vm555, %v547, %v552
    %v557 = vstv %s534
    %v558 = vmul.f32 %v557, %v546
    %v559 = vmul.f32 %v557, %v556
    %v560 = vmul.f32 %v558, %v518
    %v561 = vmul.f32 %v558, %v519
    %v562 = vmul.f32 %v559, %v520
    %v563 = vmul.f32 %v559, %v521
    %s564 = scalar_lea.vmem [#allocation7], 512
    %v565 = vld [vmem:[%s564] sm:$0xff]
    %v566 = vld [vmem:[%s564 + $0x8] sm:$0xff]
    %v567 = vld [vmem:[%s564 + $0x10] sm:$0xff]
    %v568 = vld [vmem:[%s564 + $0x18] sm:$0xff]
    %v569 = vld [vmem:[%s564 + $0x20] sm:$0xff]
    %v570 = vld [vmem:[%s564 + $0x28] sm:$0xff]
    %v571 = vld [vmem:[%s564 + $0x30] sm:$0xff]
    %v572 = vld [vmem:[%s564 + $0x38] sm:$0xff]
    %v573 = vld [vmem:[%s564 + $0x40] sm:$0xff]
    %v574 = vld [vmem:[%s564 + $0x48] sm:$0xff]
    %v575 = vld [vmem:[%s564 + $0x50] sm:$0xff]
    %v576 = vld [vmem:[%s564 + $0x58] sm:$0xff]
    %v577 = vld [vmem:[%s564 + $0x60] sm:$0xff]
    %v578 = vld [vmem:[%s564 + $0x68] sm:$0xff]
    %v579 = vld [vmem:[%s564 + $0x70] sm:$0xff]
    %v580 = vld [vmem:[%s564 + $0x78] sm:$0xff]
    %v581 = vld [vmem:[%s564 + $0x80] sm:$0xff]
    %v582 = vld [vmem:[%s564 + $0x88] sm:$0xff]
    %v583 = vld [vmem:[%s564 + $0x90] sm:$0xff]
    %v584 = vld [vmem:[%s564 + $0x98] sm:$0xff]
    %v585 = vld [vmem:[%s564 + $0xa0] sm:$0xff]
    %v586 = vld [vmem:[%s564 + $0xa8] sm:$0xff]
    %v587 = vld [vmem:[%s564 + $0xb0] sm:$0xff]
    %v588 = vld [vmem:[%s564 + $0xb8] sm:$0xff]
    %v589 = vld [vmem:[%s564 + $0xc0] sm:$0xff]
    %v590 = vld [vmem:[%s564 + $0xc8] sm:$0xff]
    %v591 = vld [vmem:[%s564 + $0xd0] sm:$0xff]
    %v592 = vld [vmem:[%s564 + $0xd8] sm:$0xff]
    %v593 = vld [vmem:[%s564 + $0xe0] sm:$0xff]
    %v594 = vld [vmem:[%s564 + $0xe8] sm:$0xff]
    %v595 = vld [vmem:[%s564 + $0xf0] sm:$0xff]
    %v596 = vld [vmem:[%s564 + $0xf8] sm:$0xff]
    %v597 = vld [vmem:[%s564 + $0x100] sm:$0xff]
    %v598 = vld [vmem:[%s564 + $0x108] sm:$0xff]
    %v599 = vld [vmem:[%s564 + $0x110] sm:$0xff]
    %v600 = vld [vmem:[%s564 + $0x118] sm:$0xff]
    %v601 = vld [vmem:[%s564 + $0x120] sm:$0xff]
    %v602 = vld [vmem:[%s564 + $0x128] sm:$0xff]
    %v603 = vld [vmem:[%s564 + $0x130] sm:$0xff]
    %v604 = vld [vmem:[%s564 + $0x138] sm:$0xff]
    %v605 = vld [vmem:[%s564 + $0x140] sm:$0xff]
    %v606 = vld [vmem:[%s564 + $0x148] sm:$0xff]
    %v607 = vld [vmem:[%s564 + $0x150] sm:$0xff]
    %v608 = vld [vmem:[%s564 + $0x158] sm:$0xff]
    %v609 = vld [vmem:[%s564 + $0x160] sm:$0xff]
    %v610 = vld [vmem:[%s564 + $0x168] sm:$0xff]
    %v611 = vld [vmem:[%s564 + $0x170] sm:$0xff]
    %v612 = vld [vmem:[%s564 + $0x178] sm:$0xff]
    %v613 = vld [vmem:[%s564 + $0x180] sm:$0xff]
    %v614 = vld [vmem:[%s564 + $0x188] sm:$0xff]
    %v615 = vld [vmem:[%s564 + $0x190] sm:$0xff]
    %v616 = vld [vmem:[%s564 + $0x198] sm:$0xff]
    %v617 = vld [vmem:[%s564 + $0x1a0] sm:$0xff]
    %v618 = vld [vmem:[%s564 + $0x1a8] sm:$0xff]
    %v619 = vld [vmem:[%s564 + $0x1b0] sm:$0xff]
    %v620 = vld [vmem:[%s564 + $0x1b8] sm:$0xff]
    %v621 = vld [vmem:[%s564 + $0x1c0] sm:$0xff]
    %v622 = vld [vmem:[%s564 + $0x1c8] sm:$0xff]
    %v623 = vld [vmem:[%s564 + $0x1d0] sm:$0xff]
    %v624 = vld [vmem:[%s564 + $0x1d8] sm:$0xff]
    %v625 = vld [vmem:[%s564 + $0x1e0] sm:$0xff]
    %v626 = vld [vmem:[%s564 + $0x1e8] sm:$0xff]
    %v627 = vld [vmem:[%s564 + $0x1f0] sm:$0xff]
    %v628 = vld [vmem:[%s564 + $0x1f8] sm:$0xff]
    %629 = vrot.lane.b32.xlu0 %v134, 125
    %v630 = vpop.permute.xlu0 %629
    %631 = vrot.lane.b32.xlu0 %v135, 125
    %v632 = vpop.permute.xlu0 %631
    %633 = vrot.lane.b32.xlu0 %v136, 125
    %v634 = vpop.permute.xlu0 %633
    %635 = vrot.lane.b32.xlu0 %v137, 125
    %v636 = vpop.permute.xlu0 %635
    %637 = vrot.lane.b32.xlu0 %v138, 125
    %v638 = vpop.permute.xlu0 %637
    %639 = vrot.lane.b32.xlu0 %v139, 125
    %v640 = vpop.permute.xlu0 %639
    %vm641 = vcmask 1022976
    %v642 = vsel %vm641, %v630, %v632
    %v643 = vsel %vm641, %v632, %v634
    %v644 = vsel %vm641, %v636, %v638
    %v645 = vsel %vm641, %v638, %v640
    %650 = vmatpush.msra.mxu0 %v595
    %651 = vmatpush.msra.mxu0 %v593
    %652 = vmatpush.msra.mxu0 %v591
    %653 = vmatpush.msra.mxu0 %v589
    %654 = vmatpush.msra.mxu0 %v587
    %655 = vmatpush.msra.mxu0 %v585
    %656 = vmatpush.msra.mxu0 %v583
    %657 = vmatpush.msra.mxu0 %v581
    %658 = vmatpush.msra.mxu0 %v579
    %659 = vmatpush.msra.mxu0 %v577
    %660 = vmatpush.msra.mxu0 %v575
    %661 = vmatpush.msra.mxu0 %v573
    %662 = vmatpush.msra.mxu0 %v571
    %663 = vmatpush.msra.mxu0 %v569
    %664 = vmatpush.msra.mxu0 %v567
    %665 = vmatpush.msra.mxu0 %v565
    %666 = vmatmul.f32.gmra.mxu0 %v642
    %v667 = vpop.f32.mrf.mxu0
    %v668 = vadd.f32 0.0, %v667
    %669 = vmatmul.f32.gmra.mxu0 %v644
    %v670 = vpop.f32.mrf.mxu0
    %v671 = vadd.f32 0.0, %v670
    %672 = vdwg.mxu0
    %673 = vmatpush.msra.mxu0 %v627
    %674 = vmatpush.msra.mxu0 %v625
    %675 = vmatpush.msra.mxu0 %v623
    %676 = vmatpush.msra.mxu0 %v621
    %677 = vmatpush.msra.mxu0 %v619
    %678 = vmatpush.msra.mxu0 %v617
    %679 = vmatpush.msra.mxu0 %v615
    %680 = vmatpush.msra.mxu0 %v613
    %681 = vmatpush.msra.mxu0 %v611
    %682 = vmatpush.msra.mxu0 %v609
    %683 = vmatpush.msra.mxu0 %v607
    %684 = vmatpush.msra.mxu0 %v605
    %685 = vmatpush.msra.mxu0 %v603
    %686 = vmatpush.msra.mxu0 %v601
    %687 = vmatpush.msra.mxu0 %v599
    %688 = vmatpush.msra.mxu0 %v597
    %689 = vmatmul.f32.gmra.mxu0 %v643
    %v690 = vpop.f32.mrf.mxu0
    %v691 = vadd.f32 %v668, %v690
    %692 = vmatmul.f32.gmra.mxu0 %v645
    %v693 = vpop.f32.mrf.mxu0
    %v694 = vadd.f32 %v671, %v693
    %695 = vdwg.mxu0
    %696 = vmatpush.msra.mxu0 %v596
    %697 = vmatpush.msra.mxu0 %v594
    %698 = vmatpush.msra.mxu0 %v592
    %699 = vmatpush.msra.mxu0 %v590
    %700 = vmatpush.msra.mxu0 %v588
    %701 = vmatpush.msra.mxu0 %v586
    %702 = vmatpush.msra.mxu0 %v584
    %703 = vmatpush.msra.mxu0 %v582
    %704 = vmatpush.msra.mxu0 %v580
    %705 = vmatpush.msra.mxu0 %v578
    %706 = vmatpush.msra.mxu0 %v576
    %707 = vmatpush.msra.mxu0 %v574
    %708 = vmatpush.msra.mxu0 %v572
    %709 = vmatpush.msra.mxu0 %v570
    %710 = vmatpush.msra.mxu0 %v568
    %711 = vmatpush.msra.mxu0 %v566
    %712 = vmatmul.f32.gmra.mxu0 %v642
    %v713 = vpop.f32.mrf.mxu0
    %v714 = vadd.f32 0.0, %v713
    %715 = vmatmul.f32.gmra.mxu0 %v644
    %v716 = vpop.f32.mrf.mxu0
    %v717 = vadd.f32 0.0, %v716
    %718 = vdwg.mxu0
    %719 = vmatpush.msra.mxu0 %v628
    %720 = vmatpush.msra.mxu0 %v626
    %721 = vmatpush.msra.mxu0 %v624
    %722 = vmatpush.msra.mxu0 %v622
    %723 = vmatpush.msra.mxu0 %v620
    %724 = vmatpush.msra.mxu0 %v618
    %725 = vmatpush.msra.mxu0 %v616
    %726 = vmatpush.msra.mxu0 %v614
    %727 = vmatpush.msra.mxu0 %v612
    %728 = vmatpush.msra.mxu0 %v610
    %729 = vmatpush.msra.mxu0 %v608
    %730 = vmatpush.msra.mxu0 %v606
    %731 = vmatpush.msra.mxu0 %v604
    %732 = vmatpush.msra.mxu0 %v602
    %733 = vmatpush.msra.mxu0 %v600
    %734 = vmatpush.msra.mxu0 %v598
    %735 = vmatmul.f32.gmra.mxu0 %v643
    %v736 = vpop.f32.mrf.mxu0
    %v737 = vadd.f32 %v714, %v736
    %738 = vmatmul.f32.gmra.mxu0 %v645
    %v739 = vpop.f32.mrf.mxu0
    %v740 = vadd.f32 %v717, %v739
    %741 = vdwg.mxu0
    %v742 = vadd.f32 %v691, %v737
    %743 = vadd.xlane.f32.xlu0 %v742
    %v744 = vpop.xlane.xlu0 %743
    %v745 = vadd.f32 %v694, %v740
    %746 = vadd.xlane.f32.xlu0 %v745
    %v747 = vpop.xlane.xlu0 %746
    %v748 = vmul.f32 %v744, %v515
    %v749 = vmul.f32 %v747, %v515
    %v750 = vsub.f32 %v691, %v748
    %v751 = vsub.f32 %v737, %v748
    %v752 = vsub.f32 %v694, %v749
    %v753 = vsub.f32 %v740, %v749
    %v754 = vmul.f32 %v750, %v750
    %v755 = vmul.f32 %v751, %v751
    %v756 = vmul.f32 %v752, %v752
    %v757 = vmul.f32 %v753, %v753
    %v758 = vadd.f32 %v754, %v755
    %759 = vadd.xlane.f32.xlu0 %v758
    %v760 = vpop.xlane.xlu0 %759
    %v761 = vadd.f32 %v756, %v757
    %762 = vadd.xlane.f32.xlu0 %v761
    %v763 = vpop.xlane.xlu0 %762
    %v764 = vmul.f32 %v760, %v515
    %v765 = vmul.f32 %v763, %v515
    %s766 = sld [smem:[#allocation3 + $0x1]]
    %v767 = vadd.f32 %v764, 1e-05
    %v768 = vadd.f32 %v765, 1e-05
    %v769 = vrsqrt.pop %v767
    %v770 = vmul.f32 %v769, %v767
    %v771 = vmul.f32 %v770, %v769
    %v772 = vmul.f32 0.5, %v771
    %v773 = vsub.f32 1.5, %v772
    %v774 = vmul.f32 %v769, %v773
    %vm775 = vweird.f32 %v767
    %vm776 = vweird.f32 %v769
    %vm777 = vmor %vm775, %vm776
    %v778 = vsel %vm777, %v769, %v774
    %v779 = vrsqrt.pop %v768
    %v780 = vmul.f32 %v779, %v768
    %v781 = vmul.f32 %v780, %v779
    %v782 = vmul.f32 0.5, %v781
    %v783 = vsub.f32 1.5, %v782
    %v784 = vmul.f32 %v779, %v783
    %vm785 = vweird.f32 %v768
    %vm786 = vweird.f32 %v779
    %vm787 = vmor %vm785, %vm786
    %v788 = vsel %vm787, %v779, %v784
    %v789 = vstv %s766
    %v790 = vmul.f32 %v789, %v778
    %v791 = vmul.f32 %v789, %v788
    %v792 = vmul.f32 %v790, %v750
    %v793 = vmul.f32 %v790, %v751
    %v794 = vmul.f32 %v791, %v752
    %v795 = vmul.f32 %v791, %v753
    %v796 = vadd.f32 %v560, %v792
    %v797 = vadd.f32 %v561, %v793
    %v798 = vadd.f32 %v562, %v794
    %v799 = vadd.f32 %v563, %v795
    %s800 = scalar_lea.vmem [#allocation7], 1024
    %v801 = vld [vmem:[%s800] sm:$0xff]
    %v802 = vld [vmem:[%s800 + $0x8] sm:$0xff]
    %v803 = vld [vmem:[%s800 + $0x10] sm:$0xff]
    %v804 = vld [vmem:[%s800 + $0x18] sm:$0xff]
    %v805 = vld [vmem:[%s800 + $0x20] sm:$0xff]
    %v806 = vld [vmem:[%s800 + $0x28] sm:$0xff]
    %v807 = vld [vmem:[%s800 + $0x30] sm:$0xff]
    %v808 = vld [vmem:[%s800 + $0x38] sm:$0xff]
    %v809 = vld [vmem:[%s800 + $0x40] sm:$0xff]
    %v810 = vld [vmem:[%s800 + $0x48] sm:$0xff]
    %v811 = vld [vmem:[%s800 + $0x50] sm:$0xff]
    %v812 = vld [vmem:[%s800 + $0x58] sm:$0xff]
    %v813 = vld [vmem:[%s800 + $0x60] sm:$0xff]
    %v814 = vld [vmem:[%s800 + $0x68] sm:$0xff]
    %v815 = vld [vmem:[%s800 + $0x70] sm:$0xff]
    %v816 = vld [vmem:[%s800 + $0x78] sm:$0xff]
    %v817 = vld [vmem:[%s800 + $0x80] sm:$0xff]
    %v818 = vld [vmem:[%s800 + $0x88] sm:$0xff]
    %v819 = vld [vmem:[%s800 + $0x90] sm:$0xff]
    %v820 = vld [vmem:[%s800 + $0x98] sm:$0xff]
    %v821 = vld [vmem:[%s800 + $0xa0] sm:$0xff]
    %v822 = vld [vmem:[%s800 + $0xa8] sm:$0xff]
    %v823 = vld [vmem:[%s800 + $0xb0] sm:$0xff]
    %v824 = vld [vmem:[%s800 + $0xb8] sm:$0xff]
    %v825 = vld [vmem:[%s800 + $0xc0] sm:$0xff]
    %v826 = vld [vmem:[%s800 + $0xc8] sm:$0xff]
    %v827 = vld [vmem:[%s800 + $0xd0] sm:$0xff]
    %v828 = vld [vmem:[%s800 + $0xd8] sm:$0xff]
    %v829 = vld [vmem:[%s800 + $0xe0] sm:$0xff]
    %v830 = vld [vmem:[%s800 + $0xe8] sm:$0xff]
    %v831 = vld [vmem:[%s800 + $0xf0] sm:$0xff]
    %v832 = vld [vmem:[%s800 + $0xf8] sm:$0xff]
    %v833 = vld [vmem:[%s800 + $0x100] sm:$0xff]
    %v834 = vld [vmem:[%s800 + $0x108] sm:$0xff]
    %v835 = vld [vmem:[%s800 + $0x110] sm:$0xff]
    %v836 = vld [vmem:[%s800 + $0x118] sm:$0xff]
    %v837 = vld [vmem:[%s800 + $0x120] sm:$0xff]
    %v838 = vld [vmem:[%s800 + $0x128] sm:$0xff]
    %v839 = vld [vmem:[%s800 + $0x130] sm:$0xff]
    %v840 = vld [vmem:[%s800 + $0x138] sm:$0xff]
    %v841 = vld [vmem:[%s800 + $0x140] sm:$0xff]
    %v842 = vld [vmem:[%s800 + $0x148] sm:$0xff]
    %v843 = vld [vmem:[%s800 + $0x150] sm:$0xff]
    %v844 = vld [vmem:[%s800 + $0x158] sm:$0xff]
    %v845 = vld [vmem:[%s800 + $0x160] sm:$0xff]
    %v846 = vld [vmem:[%s800 + $0x168] sm:$0xff]
    %v847 = vld [vmem:[%s800 + $0x170] sm:$0xff]
    %v848 = vld [vmem:[%s800 + $0x178] sm:$0xff]
    %v849 = vld [vmem:[%s800 + $0x180] sm:$0xff]
    %v850 = vld [vmem:[%s800 + $0x188] sm:$0xff]
    %v851 = vld [vmem:[%s800 + $0x190] sm:$0xff]
    %v852 = vld [vmem:[%s800 + $0x198] sm:$0xff]
    %v853 = vld [vmem:[%s800 + $0x1a0] sm:$0xff]
    %v854 = vld [vmem:[%s800 + $0x1a8] sm:$0xff]
    %v855 = vld [vmem:[%s800 + $0x1b0] sm:$0xff]
    %v856 = vld [vmem:[%s800 + $0x1b8] sm:$0xff]
    %v857 = vld [vmem:[%s800 + $0x1c0] sm:$0xff]
    %v858 = vld [vmem:[%s800 + $0x1c8] sm:$0xff]
    %v859 = vld [vmem:[%s800 + $0x1d0] sm:$0xff]
    %v860 = vld [vmem:[%s800 + $0x1d8] sm:$0xff]
    %v861 = vld [vmem:[%s800 + $0x1e0] sm:$0xff]
    %v862 = vld [vmem:[%s800 + $0x1e8] sm:$0xff]
    %v863 = vld [vmem:[%s800 + $0x1f0] sm:$0xff]
    %v864 = vld [vmem:[%s800 + $0x1f8] sm:$0xff]
    %865 = vrot.lane.b32.xlu0 %v197, 126
    %v866 = vpop.permute.xlu0 %865
    %867 = vrot.lane.b32.xlu0 %v198, 126
    %v868 = vpop.permute.xlu0 %867
    %869 = vrot.lane.b32.xlu0 %v199, 126
    %v870 = vpop.permute.xlu0 %869
    %871 = vrot.lane.b32.xlu0 %v200, 126
    %v872 = vpop.permute.xlu0 %871
    %873 = vrot.lane.b32.xlu0 %v201, 126
    %v874 = vpop.permute.xlu0 %873
    %875 = vrot.lane.b32.xlu0 %v202, 126
    %v876 = vpop.permute.xlu0 %875
    %v877 = vsel %vm94, %v866, %v868
    %v878 = vsel %vm94, %v868, %v870
    %v879 = vsel %vm94, %v872, %v874
    %v880 = vsel %vm94, %v874, %v876
    %885 = vmatpush.msra.mxu0 %v831
    %886 = vmatpush.msra.mxu0 %v829
    %887 = vmatpush.msra.mxu0 %v827
    %888 = vmatpush.msra.mxu0 %v825
    %889 = vmatpush.msra.mxu0 %v823
    %890 = vmatpush.msra.mxu0 %v821
    %891 = vmatpush.msra.mxu0 %v819
    %892 = vmatpush.msra.mxu0 %v817
    %893 = vmatpush.msra.mxu0 %v815
    %894 = vmatpush.msra.mxu0 %v813
    %895 = vmatpush.msra.mxu0 %v811
    %896 = vmatpush.msra.mxu0 %v809
    %897 = vmatpush.msra.mxu0 %v807
    %898 = vmatpush.msra.mxu0 %v805
    %899 = vmatpush.msra.mxu0 %v803
    %900 = vmatpush.msra.mxu0 %v801
    %901 = vmatmul.f32.gmra.mxu0 %v877
    %v902 = vpop.f32.mrf.mxu0
    %v903 = vadd.f32 0.0, %v902
    %904 = vmatmul.f32.gmra.mxu0 %v879
    %v905 = vpop.f32.mrf.mxu0
    %v906 = vadd.f32 0.0, %v905
    %907 = vdwg.mxu0
    %908 = vmatpush.msra.mxu0 %v863
    %909 = vmatpush.msra.mxu0 %v861
    %910 = vmatpush.msra.mxu0 %v859
    %911 = vmatpush.msra.mxu0 %v857
    %912 = vmatpush.msra.mxu0 %v855
    %913 = vmatpush.msra.mxu0 %v853
    %914 = vmatpush.msra.mxu0 %v851
    %915 = vmatpush.msra.mxu0 %v849
    %916 = vmatpush.msra.mxu0 %v847
    %917 = vmatpush.msra.mxu0 %v845
    %918 = vmatpush.msra.mxu0 %v843
    %919 = vmatpush.msra.mxu0 %v841
    %920 = vmatpush.msra.mxu0 %v839
    %921 = vmatpush.msra.mxu0 %v837
    %922 = vmatpush.msra.mxu0 %v835
    %923 = vmatpush.msra.mxu0 %v833
    %924 = vmatmul.f32.gmra.mxu0 %v878
    %v925 = vpop.f32.mrf.mxu0
    %v926 = vadd.f32 %v903, %v925
    %927 = vmatmul.f32.gmra.mxu0 %v880
    %v928 = vpop.f32.mrf.mxu0
    %v929 = vadd.f32 %v906, %v928
    %930 = vdwg.mxu0
    %931 = vmatpush.msra.mxu0 %v832
    %932 = vmatpush.msra.mxu0 %v830
    %933 = vmatpush.msra.mxu0 %v828
    %934 = vmatpush.msra.mxu0 %v826
    %935 = vmatpush.msra.mxu0 %v824
    %936 = vmatpush.msra.mxu0 %v822
    %937 = vmatpush.msra.mxu0 %v820
    %938 = vmatpush.msra.mxu0 %v818
    %939 = vmatpush.msra.mxu0 %v816
    %940 = vmatpush.msra.mxu0 %v814
    %941 = vmatpush.msra.mxu0 %v812
    %942 = vmatpush.msra.mxu0 %v810
    %943 = vmatpush.msra.mxu0 %v808
    %944 = vmatpush.msra.mxu0 %v806
    %945 = vmatpush.msra.mxu0 %v804
    %946 = vmatpush.msra.mxu0 %v802
    %947 = vmatmul.f32.gmra.mxu0 %v877
    %v948 = vpop.f32.mrf.mxu0
    %v949 = vadd.f32 0.0, %v948
    %950 = vmatmul.f32.gmra.mxu0 %v879
    %v951 = vpop.f32.mrf.mxu0
    %v952 = vadd.f32 0.0, %v951
    %953 = vdwg.mxu0
    %954 = vmatpush.msra.mxu0 %v864
    %955 = vmatpush.msra.mxu0 %v862
    %956 = vmatpush.msra.mxu0 %v860
    %957 = vmatpush.msra.mxu0 %v858
    %958 = vmatpush.msra.mxu0 %v856
    %959 = vmatpush.msra.mxu0 %v854
    %960 = vmatpush.msra.mxu0 %v852
    %961 = vmatpush.msra.mxu0 %v850
    %962 = vmatpush.msra.mxu0 %v848
    %963 = vmatpush.msra.mxu0 %v846
    %964 = vmatpush.msra.mxu0 %v844
    %965 = vmatpush.msra.mxu0 %v842
    %966 = vmatpush.msra.mxu0 %v840
    %967 = vmatpush.msra.mxu0 %v838
    %968 = vmatpush.msra.mxu0 %v836
    %969 = vmatpush.msra.mxu0 %v834
    %970 = vmatmul.f32.gmra.mxu0 %v878
    %v971 = vpop.f32.mrf.mxu0
    %v972 = vadd.f32 %v949, %v971
    %973 = vmatmul.f32.gmra.mxu0 %v880
    %v974 = vpop.f32.mrf.mxu0
    %v975 = vadd.f32 %v952, %v974
    %976 = vdwg.mxu0
    %v977 = vadd.f32 %v926, %v972
    %978 = vadd.xlane.f32.xlu0 %v977
    %v979 = vpop.xlane.xlu0 %978
    %v980 = vadd.f32 %v929, %v975
    %981 = vadd.xlane.f32.xlu0 %v980
    %v982 = vpop.xlane.xlu0 %981
    %v983 = vmul.f32 %v979, %v515
    %v984 = vmul.f32 %v982, %v515
    %v985 = vsub.f32 %v926, %v983
    %v986 = vsub.f32 %v972, %v983
    %v987 = vsub.f32 %v929, %v984
    %v988 = vsub.f32 %v975, %v984
    %v989 = vmul.f32 %v985, %v985
    %v990 = vmul.f32 %v986, %v986
    %v991 = vmul.f32 %v987, %v987
    %v992 = vmul.f32 %v988, %v988
    %v993 = vadd.f32 %v989, %v990
    %994 = vadd.xlane.f32.xlu0 %v993
    %v995 = vpop.xlane.xlu0 %994
    %v996 = vadd.f32 %v991, %v992
    %997 = vadd.xlane.f32.xlu0 %v996
    %v998 = vpop.xlane.xlu0 %997
    %v999 = vmul.f32 %v995, %v515
    %v1000 = vmul.f32 %v998, %v515
    %s1001 = sld [smem:[#allocation3 + $0x2]]
    %v1002 = vadd.f32 %v999, 1e-05
    %v1003 = vadd.f32 %v1000, 1e-05
    %v1004 = vrsqrt.pop %v1002
    %v1005 = vmul.f32 %v1004, %v1002
    %v1006 = vmul.f32 %v1005, %v1004
    %v1007 = vmul.f32 0.5, %v1006
    %v1008 = vsub.f32 1.5, %v1007
    %v1009 = vmul.f32 %v1004, %v1008
    %vm1010 = vweird.f32 %v1002
    %vm1011 = vweird.f32 %v1004
    %vm1012 = vmor %vm1010, %vm1011
    %v1013 = vsel %vm1012, %v1004, %v1009
    %v1014 = vrsqrt.pop %v1003
    %v1015 = vmul.f32 %v1014, %v1003
    %v1016 = vmul.f32 %v1015, %v1014
    %v1017 = vmul.f32 0.5, %v1016
    %v1018 = vsub.f32 1.5, %v1017
    %v1019 = vmul.f32 %v1014, %v1018
    %vm1020 = vweird.f32 %v1003
    %vm1021 = vweird.f32 %v1014
    %vm1022 = vmor %vm1020, %vm1021
    %v1023 = vsel %vm1022, %v1014, %v1019
    %v1024 = vstv %s1001
    %v1025 = vmul.f32 %v1024, %v1013
    %v1026 = vmul.f32 %v1024, %v1023
    %v1027 = vmul.f32 %v1025, %v985
    %v1028 = vmul.f32 %v1025, %v986
    %v1029 = vmul.f32 %v1026, %v987
    %v1030 = vmul.f32 %v1026, %v988
    %v1031 = vadd.f32 %v796, %v1027
    %v1032 = vadd.f32 %v797, %v1028
    %v1033 = vadd.f32 %v798, %v1029
    %v1034 = vadd.f32 %v799, %v1030
    %s1035 = scalar_lea.vmem [#allocation7], 1536
    %v1036 = vld [vmem:[%s1035] sm:$0xff]
    %v1037 = vld [vmem:[%s1035 + $0x8] sm:$0xff]
    %v1038 = vld [vmem:[%s1035 + $0x10] sm:$0xff]
    %v1039 = vld [vmem:[%s1035 + $0x18] sm:$0xff]
    %v1040 = vld [vmem:[%s1035 + $0x20] sm:$0xff]
    %v1041 = vld [vmem:[%s1035 + $0x28] sm:$0xff]
    %v1042 = vld [vmem:[%s1035 + $0x30] sm:$0xff]
    %v1043 = vld [vmem:[%s1035 + $0x38] sm:$0xff]
    %v1044 = vld [vmem:[%s1035 + $0x40] sm:$0xff]
    %v1045 = vld [vmem:[%s1035 + $0x48] sm:$0xff]
    %v1046 = vld [vmem:[%s1035 + $0x50] sm:$0xff]
    %v1047 = vld [vmem:[%s1035 + $0x58] sm:$0xff]
    %v1048 = vld [vmem:[%s1035 + $0x60] sm:$0xff]
    %v1049 = vld [vmem:[%s1035 + $0x68] sm:$0xff]
    %v1050 = vld [vmem:[%s1035 + $0x70] sm:$0xff]
    %v1051 = vld [vmem:[%s1035 + $0x78] sm:$0xff]
    %v1052 = vld [vmem:[%s1035 + $0x80] sm:$0xff]
    %v1053 = vld [vmem:[%s1035 + $0x88] sm:$0xff]
    %v1054 = vld [vmem:[%s1035 + $0x90] sm:$0xff]
    %v1055 = vld [vmem:[%s1035 + $0x98] sm:$0xff]
    %v1056 = vld [vmem:[%s1035 + $0xa0] sm:$0xff]
    %v1057 = vld [vmem:[%s1035 + $0xa8] sm:$0xff]
    %v1058 = vld [vmem:[%s1035 + $0xb0] sm:$0xff]
    %v1059 = vld [vmem:[%s1035 + $0xb8] sm:$0xff]
    %v1060 = vld [vmem:[%s1035 + $0xc0] sm:$0xff]
    %v1061 = vld [vmem:[%s1035 + $0xc8] sm:$0xff]
    %v1062 = vld [vmem:[%s1035 + $0xd0] sm:$0xff]
    %v1063 = vld [vmem:[%s1035 + $0xd8] sm:$0xff]
    %v1064 = vld [vmem:[%s1035 + $0xe0] sm:$0xff]
    %v1065 = vld [vmem:[%s1035 + $0xe8] sm:$0xff]
    %v1066 = vld [vmem:[%s1035 + $0xf0] sm:$0xff]
    %v1067 = vld [vmem:[%s1035 + $0xf8] sm:$0xff]
    %v1068 = vld [vmem:[%s1035 + $0x100] sm:$0xff]
    %v1069 = vld [vmem:[%s1035 + $0x108] sm:$0xff]
    %v1070 = vld [vmem:[%s1035 + $0x110] sm:$0xff]
    %v1071 = vld [vmem:[%s1035 + $0x118] sm:$0xff]
    %v1072 = vld [vmem:[%s1035 + $0x120] sm:$0xff]
    %v1073 = vld [vmem:[%s1035 + $0x128] sm:$0xff]
    %v1074 = vld [vmem:[%s1035 + $0x130] sm:$0xff]
    %v1075 = vld [vmem:[%s1035 + $0x138] sm:$0xff]
    %v1076 = vld [vmem:[%s1035 + $0x140] sm:$0xff]
    %v1077 = vld [vmem:[%s1035 + $0x148] sm:$0xff]
    %v1078 = vld [vmem:[%s1035 + $0x150] sm:$0xff]
    %v1079 = vld [vmem:[%s1035 + $0x158] sm:$0xff]
    %v1080 = vld [vmem:[%s1035 + $0x160] sm:$0xff]
    %v1081 = vld [vmem:[%s1035 + $0x168] sm:$0xff]
    %v1082 = vld [vmem:[%s1035 + $0x170] sm:$0xff]
    %v1083 = vld [vmem:[%s1035 + $0x178] sm:$0xff]
    %v1084 = vld [vmem:[%s1035 + $0x180] sm:$0xff]
    %v1085 = vld [vmem:[%s1035 + $0x188] sm:$0xff]
    %v1086 = vld [vmem:[%s1035 + $0x190] sm:$0xff]
    %v1087 = vld [vmem:[%s1035 + $0x198] sm:$0xff]
    %v1088 = vld [vmem:[%s1035 + $0x1a0] sm:$0xff]
    %v1089 = vld [vmem:[%s1035 + $0x1a8] sm:$0xff]
    %v1090 = vld [vmem:[%s1035 + $0x1b0] sm:$0xff]
    %v1091 = vld [vmem:[%s1035 + $0x1b8] sm:$0xff]
    %v1092 = vld [vmem:[%s1035 + $0x1c0] sm:$0xff]
    %v1093 = vld [vmem:[%s1035 + $0x1c8] sm:$0xff]
    %v1094 = vld [vmem:[%s1035 + $0x1d0] sm:$0xff]
    %v1095 = vld [vmem:[%s1035 + $0x1d8] sm:$0xff]
    %v1096 = vld [vmem:[%s1035 + $0x1e0] sm:$0xff]
    %v1097 = vld [vmem:[%s1035 + $0x1e8] sm:$0xff]
    %v1098 = vld [vmem:[%s1035 + $0x1f0] sm:$0xff]
    %v1099 = vld [vmem:[%s1035 + $0x1f8] sm:$0xff]
    %1100 = vmatpush.msra.mxu0 %v1066
    %1101 = vmatpush.msra.mxu0 %v1064
    %1102 = vmatpush.msra.mxu0 %v1062
    %1103 = vmatpush.msra.mxu0 %v1060
    %1104 = vmatpush.msra.mxu0 %v1058
    %1105 = vmatpush.msra.mxu0 %v1056
    %1106 = vmatpush.msra.mxu0 %v1054
    %1107 = vmatpush.msra.mxu0 %v1052
    %1108 = vmatpush.msra.mxu0 %v1050
    %1109 = vmatpush.msra.mxu0 %v1048
    %1110 = vmatpush.msra.mxu0 %v1046
    %1111 = vmatpush.msra.mxu0 %v1044
    %1112 = vmatpush.msra.mxu0 %v1042
    %1113 = vmatpush.msra.mxu0 %v1040
    %1114 = vmatpush.msra.mxu0 %v1038
    %1115 = vmatpush.msra.mxu0 %v1036
    %1116 = vmatmul.f32.gmra.mxu0 %v317
    %v1117 = vpop.f32.mrf.mxu0
    %v1118 = vadd.f32 0.0, %v1117
    %1119 = vmatmul.f32.gmra.mxu0 %v319
    %v1120 = vpop.f32.mrf.mxu0
    %v1121 = vadd.f32 0.0, %v1120
    %1122 = vdwg.mxu0
    %1123 = vmatpush.msra.mxu0 %v1098
    %1124 = vmatpush.msra.mxu0 %v1096
    %1125 = vmatpush.msra.mxu0 %v1094
    %1126 = vmatpush.msra.mxu0 %v1092
    %1127 = vmatpush.msra.mxu0 %v1090
    %1128 = vmatpush.msra.mxu0 %v1088
    %1129 = vmatpush.msra.mxu0 %v1086
    %1130 = vmatpush.msra.mxu0 %v1084
    %1131 = vmatpush.msra.mxu0 %v1082
    %1132 = vmatpush.msra.mxu0 %v1080
    %1133 = vmatpush.msra.mxu0 %v1078
    %1134 = vmatpush.msra.mxu0 %v1076
    %1135 = vmatpush.msra.mxu0 %v1074
    %1136 = vmatpush.msra.mxu0 %v1072
    %1137 = vmatpush.msra.mxu0 %v1070
    %1138 = vmatpush.msra.mxu0 %v1068
    %1139 = vmatmul.f32.gmra.mxu0 %v318
    %v1140 = vpop.f32.mrf.mxu0
    %v1141 = vadd.f32 %v1118, %v1140
    %1142 = vmatmul.f32.gmra.mxu0 %v320
    %v1143 = vpop.f32.mrf.mxu0
    %v1144 = vadd.f32 %v1121, %v1143
    %1145 = vdwg.mxu0
    %1146 = vmatpush.msra.mxu0 %v1067
    %1147 = vmatpush.msra.mxu0 %v1065
    %1148 = vmatpush.msra.mxu0 %v1063
    %1149 = vmatpush.msra.mxu0 %v1061
    %1150 = vmatpush.msra.mxu0 %v1059
    %1151 = vmatpush.msra.mxu0 %v1057
    %1152 = vmatpush.msra.mxu0 %v1055
    %1153 = vmatpush.msra.mxu0 %v1053
    %1154 = vmatpush.msra.mxu0 %v1051
    %1155 = vmatpush.msra.mxu0 %v1049
    %1156 = vmatpush.msra.mxu0 %v1047
    %1157 = vmatpush.msra.mxu0 %v1045
    %1158 = vmatpush.msra.mxu0 %v1043
    %1159 = vmatpush.msra.mxu0 %v1041
    %1160 = vmatpush.msra.mxu0 %v1039
    %1161 = vmatpush.msra.mxu0 %v1037
    %1162 = vmatmul.f32.gmra.mxu0 %v317
    %v1163 = vpop.f32.mrf.mxu0
    %v1164 = vadd.f32 0.0, %v1163
    %1165 = vmatmul.f32.gmra.mxu0 %v319
    %v1166 = vpop.f32.mrf.mxu0
    %v1167 = vadd.f32 0.0, %v1166
    %1168 = vdwg.mxu0
    %1169 = vmatpush.msra.mxu0 %v1099
    %1170 = vmatpush.msra.mxu0 %v1097
    %1171 = vmatpush.msra.mxu0 %v1095
    %1172 = vmatpush.msra.mxu0 %v1093
    %1173 = vmatpush.msra.mxu0 %v1091
    %1174 = vmatpush.msra.mxu0 %v1089
    %1175 = vmatpush.msra.mxu0 %v1087
    %1176 = vmatpush.msra.mxu0 %v1085
    %1177 = vmatpush.msra.mxu0 %v1083
    %1178 = vmatpush.msra.mxu0 %v1081
    %1179 = vmatpush.msra.mxu0 %v1079
    %1180 = vmatpush.msra.mxu0 %v1077
    %1181 = vmatpush.msra.mxu0 %v1075
    %1182 = vmatpush.msra.mxu0 %v1073
    %1183 = vmatpush.msra.mxu0 %v1071
    %1184 = vmatpush.msra.mxu0 %v1069
    %1185 = vmatmul.f32.gmra.mxu0 %v318
    %v1186 = vpop.f32.mrf.mxu0
    %v1187 = vadd.f32 %v1164, %v1186
    %1188 = vmatmul.f32.gmra.mxu0 %v320
    %v1189 = vpop.f32.mrf.mxu0
    %v1190 = vadd.f32 %v1167, %v1189
    %1191 = vdwg.mxu0
    %v1192 = vadd.f32 %v1141, %v1187
    %1193 = vadd.xlane.f32.xlu0 %v1192
    %v1194 = vpop.xlane.xlu0 %1193
    %v1195 = vadd.f32 %v1144, %v1190
    %1196 = vadd.xlane.f32.xlu0 %v1195
    %v1197 = vpop.xlane.xlu0 %1196
    %v1198 = vmul.f32 %v1194, %v515
    %v1199 = vmul.f32 %v1197, %v515
    %v1200 = vsub.f32 %v1141, %v1198
    %v1201 = vsub.f32 %v1187, %v1198
    %v1202 = vsub.f32 %v1144, %v1199
    %v1203 = vsub.f32 %v1190, %v1199
    %v1204 = vmul.f32 %v1200, %v1200
    %v1205 = vmul.f32 %v1201, %v1201
    %v1206 = vmul.f32 %v1202, %v1202
    %v1207 = vmul.f32 %v1203, %v1203
    %v1208 = vadd.f32 %v1204, %v1205
    %1209 = vadd.xlane.f32.xlu0 %v1208
    %v1210 = vpop.xlane.xlu0 %1209
    %v1211 = vadd.f32 %v1206, %v1207
    %1212 = vadd.xlane.f32.xlu0 %v1211
    %v1213 = vpop.xlane.xlu0 %1212
    %v1214 = vmul.f32 %v1210, %v515
    %v1215 = vmul.f32 %v1213, %v515
    %s1216 = sld [smem:[#allocation3 + $0x3]]
    %v1217 = vadd.f32 %v1214, 1e-05
    %v1218 = vadd.f32 %v1215, 1e-05
    %v1219 = vrsqrt.pop %v1217
    %v1220 = vmul.f32 %v1219, %v1217
    %v1221 = vmul.f32 %v1220, %v1219
    %v1222 = vmul.f32 0.5, %v1221
    %v1223 = vsub.f32 1.5, %v1222
    %v1224 = vmul.f32 %v1219, %v1223
    %vm1225 = vweird.f32 %v1217
    %vm1226 = vweird.f32 %v1219
    %vm1227 = vmor %vm1225, %vm1226
    %v1228 = vsel %vm1227, %v1219, %v1224
    %v1229 = vrsqrt.pop %v1218
    %v1230 = vmul.f32 %v1229, %v1218
    %v1231 = vmul.f32 %v1230, %v1229
    %v1232 = vmul.f32 0.5, %v1231
    %v1233 = vsub.f32 1.5, %v1232
    %v1234 = vmul.f32 %v1229, %v1233
    %vm1235 = vweird.f32 %v1218
    %vm1236 = vweird.f32 %v1229
    %vm1237 = vmor %vm1235, %vm1236
    %v1238 = vsel %vm1237, %v1229, %v1234
    %v1239 = vstv %s1216
    %v1240 = vmul.f32 %v1239, %v1228
    %v1241 = vmul.f32 %v1239, %v1238
    %v1242 = vmul.f32 %v1240, %v1200
    %v1243 = vmul.f32 %v1240, %v1201
    %v1244 = vmul.f32 %v1241, %v1202
    %v1245 = vmul.f32 %v1241, %v1203
    %v1246 = vadd.f32 %v1031, %v1242
    %v1247 = vadd.f32 %v1032, %v1243
    %v1248 = vadd.f32 %v1033, %v1244
    %v1249 = vadd.f32 %v1034, %v1245
    %s1250 = sld [smem:[#allocation2]]
    %v1251 = vstv %s1250
    %v1252 = vadd.f32 %v1246, %v1251
    %v1253 = vadd.f32 %v1247, %v1251
    %v1254 = vadd.f32 %v1248, %v1251
    %v1255 = vadd.f32 %v1249, %v1251
    %1256 = vst [vmem:[#allocation10] sm:$0xff] %v1252
    %1257 = vst [vmem:[#allocation10 + $0x8] sm:$0xff] %v1253
    %1258 = vst [vmem:[#allocation10 + $0x10] sm:$0xff] %v1254
    %1259 = vst [vmem:[#allocation10 + $0x18] sm:$0xff] %v1255
    // Predicated region
    $region30: #{tpu_custom_call.1} parent=1 // pred_check
      _
    $region31: #{tpu_custom_call.1} parent=1 // pred_check_branch
      %1261 = sbr.rel (0) target = $region33
    $region32: #{tpu_custom_call.1} parent=1 // pred_region
      %1263 = vsyncadd [#allocation5], 0
      %s1264 = sshll.u32 [#allocation10], 4
      %s1265 = int_to_ptr.vmem [resolvable:$true] %s1264
      %s1266 = sshll.u32 %s4, 4
      %s1267 = int_to_ptr.hbm [resolvable:$true] %s1266
      %1272 = dma.vmem_to_hbm [thread:$0]  %s1265, 512, %s1267, [#allocation5], 256, 256, 16
    $region33: #{tpu_custom_call.1} parent=1 // pred_fallthru
      _
    // Predicated region
    $region34: #{tpu_custom_call.1} parent=1 // pred_check
      _
    $region35: #{tpu_custom_call.1} parent=1 // pred_check_branch
      %1274 = sbr.rel (0) target = $region37
    $region36: #{tpu_custom_call.1} parent=1 // pred_region
      %1276 = dma.done [#allocation5], 512
    $region37: #{tpu_custom_call.1} parent=1 // pred_fallthru
      _
    %1277 = vsyncpa [#allocation4], 1
    %1278 = vsyncpa [#allocation9], 1
    %1279 = vsyncpa [#allocation5], 1
    %1280 = vsyncpa [#allocation6], 1

</llo_original>
